<compile_context>
chip_gen: v6e
topology: v6e:2x2x1
jax: 0.10.0
libtpu: 0.0.40
codegen_flags: <defaults>
</compile_context>

<pallas_src>
import math
from functools import partial

import jax
import jax.numpy as jnp
from jax.experimental import pallas as pl
from jax.experimental.pallas import tpu as pltpu

# ----------------------- synthetic model configuration -----------------------
FSQ_LEVELS = (8, 6, 5)                      # FSQ levels -> codebook_dim C = 3
_BASIS = tuple(math.prod(FSQ_LEVELS[:i]) for i in range(len(FSQ_LEVELS)))  # (1, 8, 48)
C_FSQ = len(FSQ_LEVELS)
D_MODEL = 32                                # FSQ project_out dim == decoder width
N_LAYERS = 2
D_MLP = 64
D_OUT = 3                                   # xyz coordinates per token
OUT_PAD = 128                               # lane-dense padded output width

assert 4 * D_MODEL == OUT_PAD               # [wq|wk|wv|wo] slab width == padded head width
assert D_MLP <= OUT_PAD

# Float-floor digit extraction (with the 1e-3 guard) is exact only while the smallest
# nonzero fractional step 1/basis and 1/level stay well above the guard.
assert max(max(FSQ_LEVELS), max(_BASIS)) < 512, "FSQ float digit-decompose bound violated"

# ---- row layout of the packed f32 vector slab (each row padded to 128 lanes) ----
ROW_WP = 0                                  # rows 0..C-1 : FSQ project_out rows (D_MODEL lanes)
ROW_BP = C_FSQ                              # project_out bias
ROW_LAYER0 = C_FSQ + 1
ROWS_PER_LAYER = 6                          # ln1g, ln1b, ln2g, ln2b, b1(D_MLP), b2
ROW_HEAD = ROW_LAYER0 + ROWS_PER_LAYER * N_LAYERS   # lnfg, lnfb, bout(OUT_PAD)
VEC_ROWS = ((ROW_HEAD + 3 + 7) // 8) * 8


# --------------------------------- kernel ------------------------------------
def _bio2token_decoder_kernel(
    idx_ref,     # (B_BLK*L, 1)  f32  token indices (exact: codebook size 240 << 2^24)
    mask_ref,    # (B_BLK, 1, L) f32  eos mask (1 = valid key)
    wqkvo_ref,   # (N_LAYERS+1, D, 4D) bf16: per layer [wq*scale | wk | wv | wo]; last = padded wout
    wmlp1_ref,   # (N_LAYERS, D, D_MLP) bf16
    wmlp2_ref,   # (N_LAYERS, D_MLP, D) bf16
    vec_ref,     # (VEC_ROWS, 128) f32 LN gains/biases, matmul biases, FSQ rows
    out_ref,     # (B_BLK*L, OUT_PAD) f32, lane-dense
):
    f32, bf16 = jnp.float32, jnp.bfloat16
    D = D_MODEL
    N = idx_ref.shape[0]
    B_BLK = mask_ref.shape[0]
    L = mask_ref.shape[2]

    vec = vec_ref[...]                                            # (VEC_ROWS, 128) f32, one load

    def vrow(r, width=D_MODEL):
        return vec[r:r + 1, :width]                               # (1, width)

    def layer_norm(x, g, b):
        # one-pass variance: E[x^2] - E[x]^2 (one fewer (N,D) VALU pass than two-pass)
        mu = jnp.mean(x, axis=-1, keepdims=True)
        var = jnp.mean(x * x, axis=-1, keepdims=True) - mu * mu
        return (x - mu) * jax.lax.rsqrt(var + 1e-5) * g + b

    # ---- FSQ indices_to_codes (digit decompose + scale/shift inverse) + project_out ----
    # Divides replaced by constant-reciprocal multiplies; exact under the asserted bound.
    idx_f = idx_ref[...]                                          # (N, 1)
    x = jnp.zeros((N, D), f32) + vrow(ROW_BP)                     # project_out bias
    for i, (lvl, basis) in enumerate(zip(FSQ_LEVELS, _BASIS)):
        d = jnp.floor(idx_f * (1.0 / float(basis)) + 1e-3)        # idx // basis
        d = d - float(lvl) * jnp.floor(d * (1.0 / float(lvl)) + 1e-3)   # ... % level
        half = float(lvl // 2)
        code_i = (d - half) * (1.0 / half)                        # (N, 1), in [-1, 1]
        x = x + code_i * vrow(ROW_WP + i)                         # project_out, VPU broadcast

    # Hoisted out of the layer loop (JAX does not CSE broadcast_in_dim).
    # NOTE: a fully-masked row yields uniform attention weights (all keys biased by -1e9),
    # matching the reference behavior.
    key_bias = [(1.0 - mask_ref[bi]) * (-1e9) for bi in range(B_BLK)]   # each (1, L)

    # ---- decoder blocks (pre-LN masked attention + GELU MLP, residual) ----
    for l in range(N_LAYERS):
        base = ROW_LAYER0 + l * ROWS_PER_LAYER
        w_attn = wqkvo_ref[l]                                     # (D, 4D) bf16
        wqkv = w_attn[:, :3 * D]                                  # (D, 3D)  (softmax scale folded)
        wo = w_attn[:, 3 * D:]                                    # (D, D)
        w1 = wmlp1_ref[l]                                         # (D, D_MLP)
        w2 = wmlp2_ref[l]                                         # (D_MLP, D)

        xn = layer_norm(x, vrow(base + 0), vrow(base + 1)).astype(bf16)
        qkv = jnp.dot(xn, wqkv, preferred_element_type=f32)       # (N, 3D), one MXU issue
        q = qkv[:, :D].astype(bf16)
        k = qkv[:, D:2 * D].astype(bf16)
        v = qkv[:, 2 * D:].astype(bf16)

        a_rows = []
        for bi in range(B_BLK):                                   # attention mixes within a batch
            r0 = bi * L
            s = jnp.einsum('qd,kd->qk', q[r0:r0 + L], k[r0:r0 + L],
                           preferred_element_type=f32) + key_bias[bi]
            s_max = jnp.max(s, axis=-1, keepdims=True)
            e = jnp.exp(s - s_max)
            p = e * pl.reciprocal(jnp.sum(e, axis=-1, keepdims=True), approx=True)  # EUP divide
            a_rows.append(jnp.dot(p.astype(bf16), v[r0:r0 + L],
                                  preferred_element_type=f32))
        a = a_rows[0] if B_BLK == 1 else jnp.concatenate(a_rows, axis=0)   # (N, D)
        x = x + jnp.dot(a.astype(bf16), wo, preferred_element_type=f32)

        xn = layer_norm(x, vrow(base + 2), vrow(base + 3)).astype(bf16)
        h = jnp.dot(xn, w1, preferred_element_type=f32) + vrow(base + 4, D_MLP)
        h = jax.nn.gelu(h, approximate=True)                      # f32 (EUP tanh)
        x = x + jnp.dot(h.astype(bf16), w2, preferred_element_type=f32) + vrow(base + 5)

    # ---- output head: hidden -> 3D coordinates, written lane-dense (128-wide pad) ----
    xn = layer_norm(x, vrow(ROW_HEAD + 0), vrow(ROW_HEAD + 1)).astype(bf16)
    out_ref[...] = (jnp.dot(xn, wqkvo_ref[N_LAYERS], preferred_element_type=f32)
                    + vrow(ROW_HEAD + 2, OUT_PAD))


# --------------------------- one-time parameter packing ----------------------
def prepare_params(params):
    """Pack raw parameters into a few DMA-friendly slabs. Run once at load time."""
    f32, bf16 = jnp.float32, jnp.bfloat16
    D = D_MODEL
    scale = 1.0 / math.sqrt(D)

    # bf16 attention + head slab: per layer [wq*scale | wk | wv | wo]; last entry padded wout.
    wqkvo = jnp.zeros((N_LAYERS + 1, D, 4 * D), f32)
    for l in range(N_LAYERS):
        wqkvo = wqkvo.at[l, :, 0 * D:1 * D].set(params['wq'][l] * scale)
        wqkvo = wqkvo.at[l, :, 1 * D:2 * D].set(params['wk'][l])
        wqkvo = wqkvo.at[l, :, 2 * D:3 * D].set(params['wv'][l])
        wqkvo = wqkvo.at[l, :, 3 * D:4 * D].set(params['wo'][l])
    wqkvo = wqkvo.at[N_LAYERS, :, :D_OUT].set(params['wout'])
    wqkvo = wqkvo.astype(bf16)

    wmlp1 = params['w1'].astype(bf16)                 # (N_LAYERS, D, D_MLP)
    wmlp2 = params['w2'].astype(bf16)                 # (N_LAYERS, D_MLP, D)

    vec = jnp.zeros((VEC_ROWS, OUT_PAD), f32)
    vec = vec.at[ROW_WP:ROW_WP + C_FSQ, :D].set(params['wp'])
    vec = vec.at[ROW_BP, :D].set(params['bp'].reshape(D))
    for l in range(N_LAYERS):
        base = ROW_LAYER0 + l * ROWS_PER_LAYER
        vec = vec.at[base + 0, :D].set(params['ln1g'][l].reshape(D))
        vec = vec.at[base + 1, :D].set(params['ln1b'][l].reshape(D))
        vec = vec.at[base + 2, :D].set(params['ln2g'][l].reshape(D))
        vec = vec.at[base + 3, :D].set(params['ln2b'][l].reshape(D))
        vec = vec.at[base + 4, :D_MLP].set(params['b1'][l].reshape(D_MLP))
        vec = vec.at[base + 5, :D].set(params['b2'][l].reshape(D))
    vec = vec.at[ROW_HEAD + 0, :D].set(params['lnfg'].reshape(D))
    vec = vec.at[ROW_HEAD + 1, :D].set(params['lnfb'].reshape(D))
    vec = vec.at[ROW_HEAD + 2, :D_OUT].set(params['bout'].reshape(D_OUT))

    return dict(wqkvo=wqkvo, wmlp1=wmlp1, wmlp2=wmlp2, vec=vec)


# --------------------------------- wrapper -----------------------------------
@partial(jax.jit, static_argnames=("b_blk",))
def bio2token_decoder(packed, indices, eos_mask, b_blk=None):
    """indices: (B, L) int FSQ codebook indices; eos_mask: (B, L) {0,1} valid-token mask.
    b_blk: batch rows per program (default B -> single program; use B//2 on v7x)."""
    B, L = indices.shape
    f32 = jnp.float32
    if b_blk is None:
        b_blk = B
    assert B % b_blk == 0 and L % 8 == 0
    n_prog = B // b_blk

    idx_col = indices.astype(f32).reshape(B * L, 1)           # indices <= 239 -> exact in f32
    mask3 = eos_mask.astype(f32).reshape(B, 1, L)

    def resident(a):                      # weights: same block every step (stay resident)
        nd = a.ndim
        return pl.BlockSpec(a.shape, lambda b, _nd=nd: (0,) * _nd)

    out = pl.pallas_call(
        _bio2token_decoder_kernel,
        out_shape=jax.ShapeDtypeStruct((B * L, OUT_PAD), f32),
        grid=(n_prog,),
        in_specs=[
            pl.BlockSpec((b_blk * L, 1), lambda b: (b, 0)),
            pl.BlockSpec((b_blk, 1, L), lambda b: (b, 0, 0)),
            resident(packed['wqkvo']),
            resident(packed['wmlp1']),
            resident(packed['wmlp2']),
            resident(packed['vec']),
        ],
        out_specs=pl.BlockSpec((b_blk * L, OUT_PAD), lambda b: (b, 0)),
        compiler_params=pltpu.CompilerParams(dimension_semantics=("parallel",)),
    )(idx_col, mask3, packed['wqkvo'], packed['wmlp1'], packed['wmlp2'], packed['vec'])
    return out.reshape(B, L, OUT_PAD)[..., :D_OUT]            # (B, L, 3)


# ------------------------ deterministic parameter init -----------------------
def init_params(key):
    ks = jax.random.split(key, 8)

    def nrm(k, shape, scale=0.02):
        return (scale * jax.random.normal(k, shape)).astype(jnp.float32)

    return dict(
        wp=nrm(ks[0], (C_FSQ, D_MODEL)),
        bp=jnp.zeros((1, D_MODEL), jnp.float32),
        ln1g=jnp.ones((N_LAYERS, 1, D_MODEL), jnp.float32),
        ln1b=jnp.zeros((N_LAYERS, 1, D_MODEL), jnp.float32),
        wq=nrm(ks[1], (N_LAYERS, D_MODEL, D_MODEL)),
        wk=nrm(ks[2], (N_LAYERS, D_MODEL, D_MODEL)),
        wv=nrm(ks[3], (N_LAYERS, D_MODEL, D_MODEL)),
        wo=nrm(ks[4], (N_LAYERS, D_MODEL, D_MODEL)),
        ln2g=jnp.ones((N_LAYERS, 1, D_MODEL), jnp.float32),
        ln2b=jnp.zeros((N_LAYERS, 1, D_MODEL), jnp.float32),
        w1=nrm(ks[5], (N_LAYERS, D_MODEL, D_MLP)),
        b1=jnp.zeros((N_LAYERS, 1, D_MLP), jnp.float32),
        w2=nrm(ks[6], (N_LAYERS, D_MLP, D_MODEL)),
        b2=jnp.zeros((N_LAYERS, 1, D_MODEL), jnp.float32),
        lnfg=jnp.ones((1, D_MODEL), jnp.float32),
        lnfb=jnp.zeros((1, D_MODEL), jnp.float32),
        wout=nrm(ks[7], (D_MODEL, D_OUT)),
        bout=jnp.zeros((1, D_OUT), jnp.float32),
    )


# ------------------------------ pure-JAX reference ----------------------------
def reference_forward(params, indices, eos_mask):
    """Same precision policy as the kernel (bf16 matmul operands, f32 accumulation,
    f32 LN / softmax / GELU); softmax scale applied on scores, exact softmax divide."""
    f32, bf16 = jnp.float32, jnp.bfloat16

    def layer_norm(x, g, b):
        mu = jnp.mean(x, axis=-1, keepdims=True)
        var = jnp.mean(jnp.square(x - mu), axis=-1, keepdims=True)
        return (x - mu) * jax.lax.rsqrt(var + 1e-5) * g + b

    def mm(a, w):
        return jnp.einsum('...ij,jk->...ik', a.astype(bf16), w.astype(bf16),
                          preferred_element_type=f32)

    idx = indices.astype(jnp.int32)
    codes = []
    for lvl, basis in zip(FSQ_LEVELS, _BASIS):
        d = (idx // basis) % lvl
        half = lvl // 2
        codes.append((d.astype(f32) - half) / half)
    codes = jnp.stack(codes, axis=-1)                                   # (B, L, C)
    x = jnp.einsum('blc,cd->bld', codes, params['wp']) + params['bp']   # f32 (tiny K=3)

    mask = eos_mask.astype(f32)
    key_bias = (1.0 - mask)[:, None, :] * (-1e9)
    scale = 1.0 / math.sqrt(D_MODEL)
    for l in range(N_LAYERS):
        xn = layer_norm(x, params['ln1g'][l], params['ln1b'][l])
        q = mm(xn, params['wq'][l])
        k = mm(xn, params['wk'][l])
        v = mm(xn, params['wv'][l])
        s = jnp.einsum('bqe,bke->bqk', q.astype(bf16), k.astype(bf16),
                       preferred_element_type=f32) * scale + key_bias
        p = jax.nn.softmax(s, axis=-1)
        a = jnp.einsum('bqk,bke->bqe', p.astype(bf16), v.astype(bf16),
                       preferred_element_type=f32)
        x = x + mm(a, params['wo'][l])
        xn = layer_norm(x, params['ln2g'][l], params['ln2b'][l])
        h = jax.nn.gelu(mm(xn, params['w1'][l]) + params['b1'][l], approximate=True)
        x = x + mm(h, params['w2'][l]) + params['b2'][l]
    xn = layer_norm(x, params['lnfg'], params['lnfb'])
    return mm(xn, params['wout']) + params['bout']


# ----------------------------------- main -------------------------------------
if __name__ == "__main__":
    key = jax.random.PRNGKey(0)
    pkey, ikey = jax.random.split(key)
    params = init_params(pkey)
    packed = prepare_params(params)       # one-time packing, hoisted out of the call path

    B, L = 2, 16
    codebook_size = math.prod(FSQ_LEVELS)
    indices = jax.random.randint(ikey, (B, L), 0, codebook_size, dtype=jnp.int32)
    lens = jnp.array([L, L - 5])
    eos_mask = (jnp.arange(L)[None, :] < lens[:, None]).astype(jnp.float32)

    out = jax.block_until_ready(bio2token_decoder(packed, indices, eos_mask))
    assert out.shape == (B, L, D_OUT) and out.dtype == jnp.float32

    ref = jax.block_until_ready(reference_forward(params, indices, eos_mask))
    err = jnp.max(jnp.abs(out - ref))
    assert jnp.allclose(out, ref, atol=5e-3, rtol=5e-2), f"max abs err = {err}"

    print("KERNEL_OK")
</pallas_src>

<mosaic_0001>
module attributes {stable_mosaic.version = 11 : i64} {
  func.func @_bio2token_decoder_kernel(%arg0: i32, %arg1: memref<32x1xf32, #tpu.memory_space<vmem>>, %arg2: memref<2x1x16xf32, #tpu.memory_space<vmem>>, %arg3: memref<3x32x128xbf16, #tpu.memory_space<vmem>>, %arg4: memref<2x32x64xbf16, #tpu.memory_space<vmem>>, %arg5: memref<2x64x32xbf16, #tpu.memory_space<vmem>>, %arg6: memref<24x128xf32, #tpu.memory_space<vmem>>, %arg7: memref<32x128xf32, #tpu.memory_space<vmem>>) attributes {dimension_semantics = [#tpu.dimension_semantics<parallel>], iteration_bounds = array<i64: 1>, scalar_prefetch = 0 : i64, scratch_operands = 0 : i64, tpu.core_type = #tpu.core_type<tc>, window_params = [{transform_indices = @transform_0, window_bounds = array<i64: 32, 1>}, {transform_indices = @transform_1, window_bounds = array<i64: 2, 1, 16>}, {pipeline_mode = #tpu.pipeline_mode<synchronous>, transform_indices = @transform_2, window_bounds = array<i64: 3, 32, 128>}, {pipeline_mode = #tpu.pipeline_mode<synchronous>, transform_indices = @transform_3, window_bounds = array<i64: 2, 32, 64>}, {pipeline_mode = #tpu.pipeline_mode<synchronous>, transform_indices = @transform_4, window_bounds = array<i64: 2, 64, 32>}, {pipeline_mode = #tpu.pipeline_mode<synchronous>, transform_indices = @transform_5, window_bounds = array<i64: 24, 128>}, {transform_indices = @transform_6, window_bounds = array<i64: 32, 128>}]} {
    %c0 = arith.constant 0 : index
    %c0_0 = arith.constant 0 : index
    %0 = vector.load %arg6[%c0, %c0_0] : memref<24x128xf32, #tpu.memory_space<vmem>>, vector<24x128xf32>
    %c0_1 = arith.constant 0 : index
    %c0_2 = arith.constant 0 : index
    %1 = vector.load %arg1[%c0_1, %c0_2] : memref<32x1xf32, #tpu.memory_space<vmem>>, vector<32x1xf32>
    %cst = arith.constant 0.000000e+00 : f32
    %2 = vector.broadcast %cst : f32 to vector<32x32xf32>
    %3 = vector.extract_strided_slice %0 {offsets = [3, 0], sizes = [1, 32], strides = [1, 1]} : vector<24x128xf32> to vector<1x32xf32>
    %4 = vector.broadcast %3 : vector<1x32xf32> to vector<32x32xf32>
    %5 = arith.addf %2, %4 : vector<32x32xf32>
    %cst_3 = arith.constant 1.000000e+00 : f32
    %6 = vector.broadcast %cst_3 : f32 to vector<32x1xf32>
    %7 = arith.mulf %1, %6 : vector<32x1xf32>
    %cst_4 = arith.constant 1.000000e-03 : f32
    %8 = vector.broadcast %cst_4 : f32 to vector<32x1xf32>
    %9 = arith.addf %7, %8 : vector<32x1xf32>
    %10 = math.floor %9 : vector<32x1xf32>
    %cst_5 = arith.constant 1.250000e-01 : f32
    %11 = vector.broadcast %cst_5 : f32 to vector<32x1xf32>
    %12 = arith.mulf %10, %11 : vector<32x1xf32>
    %cst_6 = arith.constant 1.000000e-03 : f32
    %13 = vector.broadcast %cst_6 : f32 to vector<32x1xf32>
    %14 = arith.addf %12, %13 : vector<32x1xf32>
    %15 = math.floor %14 : vector<32x1xf32>
    %cst_7 = arith.constant 8.000000e+00 : f32
    %16 = vector.broadcast %cst_7 : f32 to vector<32x1xf32>
    %17 = arith.mulf %16, %15 : vector<32x1xf32>
    %18 = arith.subf %10, %17 : vector<32x1xf32>
    %cst_8 = arith.constant 4.000000e+00 : f32
    %19 = vector.broadcast %cst_8 : f32 to vector<32x1xf32>
    %20 = arith.subf %18, %19 : vector<32x1xf32>
    %cst_9 = arith.constant 2.500000e-01 : f32
    %21 = vector.broadcast %cst_9 : f32 to vector<32x1xf32>
    %22 = arith.mulf %20, %21 : vector<32x1xf32>
    %23 = vector.extract_strided_slice %0 {offsets = [0, 0], sizes = [1, 32], strides = [1, 1]} : vector<24x128xf32> to vector<1x32xf32>
    %24 = vector.broadcast %22 : vector<32x1xf32> to vector<32x32xf32>
    %25 = vector.broadcast %23 : vector<1x32xf32> to vector<32x32xf32>
    %26 = arith.mulf %24, %25 : vector<32x32xf32>
    %27 = arith.addf %5, %26 : vector<32x32xf32>
    %cst_10 = arith.constant 1.250000e-01 : f32
    %28 = vector.broadcast %cst_10 : f32 to vector<32x1xf32>
    %29 = arith.mulf %1, %28 : vector<32x1xf32>
    %cst_11 = arith.constant 1.000000e-03 : f32
    %30 = vector.broadcast %cst_11 : f32 to vector<32x1xf32>
    %31 = arith.addf %29, %30 : vector<32x1xf32>
    %32 = math.floor %31 : vector<32x1xf32>
    %cst_12 = arith.constant 0.166666672 : f32
    %33 = vector.broadcast %cst_12 : f32 to vector<32x1xf32>
    %34 = arith.mulf %32, %33 : vector<32x1xf32>
    %cst_13 = arith.constant 1.000000e-03 : f32
    %35 = vector.broadcast %cst_13 : f32 to vector<32x1xf32>
    %36 = arith.addf %34, %35 : vector<32x1xf32>
    %37 = math.floor %36 : vector<32x1xf32>
    %cst_14 = arith.constant 6.000000e+00 : f32
    %38 = vector.broadcast %cst_14 : f32 to vector<32x1xf32>
    %39 = arith.mulf %38, %37 : vector<32x1xf32>
    %40 = arith.subf %32, %39 : vector<32x1xf32>
    %cst_15 = arith.constant 3.000000e+00 : f32
    %41 = vector.broadcast %cst_15 : f32 to vector<32x1xf32>
    %42 = arith.subf %40, %41 : vector<32x1xf32>
    %cst_16 = arith.constant 0.333333343 : f32
    %43 = vector.broadcast %cst_16 : f32 to vector<32x1xf32>
    %44 = arith.mulf %42, %43 : vector<32x1xf32>
    %45 = vector.extract_strided_slice %0 {offsets = [1, 0], sizes = [1, 32], strides = [1, 1]} : vector<24x128xf32> to vector<1x32xf32>
    %46 = vector.broadcast %44 : vector<32x1xf32> to vector<32x32xf32>
    %47 = vector.broadcast %45 : vector<1x32xf32> to vector<32x32xf32>
    %48 = arith.mulf %46, %47 : vector<32x32xf32>
    %49 = arith.addf %27, %48 : vector<32x32xf32>
    %cst_17 = arith.constant 0.020833334 : f32
    %50 = vector.broadcast %cst_17 : f32 to vector<32x1xf32>
    %51 = arith.mulf %1, %50 : vector<32x1xf32>
    %cst_18 = arith.constant 1.000000e-03 : f32
    %52 = vector.broadcast %cst_18 : f32 to vector<32x1xf32>
    %53 = arith.addf %51, %52 : vector<32x1xf32>
    %54 = math.floor %53 : vector<32x1xf32>
    %cst_19 = arith.constant 2.000000e-01 : f32
    %55 = vector.broadcast %cst_19 : f32 to vector<32x1xf32>
    %56 = arith.mulf %54, %55 : vector<32x1xf32>
    %cst_20 = arith.constant 1.000000e-03 : f32
    %57 = vector.broadcast %cst_20 : f32 to vector<32x1xf32>
    %58 = arith.addf %56, %57 : vector<32x1xf32>
    %59 = math.floor %58 : vector<32x1xf32>
    %cst_21 = arith.constant 5.000000e+00 : f32
    %60 = vector.broadcast %cst_21 : f32 to vector<32x1xf32>
    %61 = arith.mulf %60, %59 : vector<32x1xf32>
    %62 = arith.subf %54, %61 : vector<32x1xf32>
    %cst_22 = arith.constant 2.000000e+00 : f32
    %63 = vector.broadcast %cst_22 : f32 to vector<32x1xf32>
    %64 = arith.subf %62, %63 : vector<32x1xf32>
    %cst_23 = arith.constant 5.000000e-01 : f32
    %65 = vector.broadcast %cst_23 : f32 to vector<32x1xf32>
    %66 = arith.mulf %64, %65 : vector<32x1xf32>
    %67 = vector.extract_strided_slice %0 {offsets = [2, 0], sizes = [1, 32], strides = [1, 1]} : vector<24x128xf32> to vector<1x32xf32>
    %68 = vector.broadcast %66 : vector<32x1xf32> to vector<32x32xf32>
    %69 = vector.broadcast %67 : vector<1x32xf32> to vector<32x32xf32>
    %70 = arith.mulf %68, %69 : vector<32x32xf32>
    %71 = arith.addf %49, %70 : vector<32x32xf32>
    %c0_24 = arith.constant 0 : index
    %c0_25 = arith.constant 0 : index
    %c0_26 = arith.constant 0 : index
    %72 = vector.load %arg2[%c0_24, %c0_25, %c0_26] : memref<2x1x16xf32, #tpu.memory_space<vmem>>, vector<1x1x16xf32>
    %73 = vector.shape_cast %72 : vector<1x1x16xf32> to vector<1x16xf32>
    %cst_27 = arith.constant 1.000000e+00 : f32
    %74 = vector.broadcast %cst_27 : f32 to vector<1x16xf32>
    %75 = arith.subf %74, %73 : vector<1x16xf32>
    %cst_28 = arith.constant -1.000000e+09 : f32
    %76 = vector.broadcast %cst_28 : f32 to vector<1x16xf32>
    %77 = arith.mulf %75, %76 : vector<1x16xf32>
    %c1 = arith.constant 1 : index
    %c0_29 = arith.constant 0 : index
    %c0_30 = arith.constant 0 : index
    %78 = vector.load %arg2[%c1, %c0_29, %c0_30] : memref<2x1x16xf32, #tpu.memory_space<vmem>>, vector<1x1x16xf32>
    %79 = vector.shape_cast %78 : vector<1x1x16xf32> to vector<1x16xf32>
    %cst_31 = arith.constant 1.000000e+00 : f32
    %80 = vector.broadcast %cst_31 : f32 to vector<1x16xf32>
    %81 = arith.subf %80, %79 : vector<1x16xf32>
    %cst_32 = arith.constant -1.000000e+09 : f32
    %82 = vector.broadcast %cst_32 : f32 to vector<1x16xf32>
    %83 = arith.mulf %81, %82 : vector<1x16xf32>
    %c0_33 = arith.constant 0 : index
    %c0_34 = arith.constant 0 : index
    %c0_35 = arith.constant 0 : index
    %84 = vector.load %arg3[%c0_33, %c0_34, %c0_35] : memref<3x32x128xbf16, #tpu.memory_space<vmem>>, vector<1x32x128xbf16>
    %85 = vector.shape_cast %84 : vector<1x32x128xbf16> to vector<32x128xbf16>
    %86 = vector.extract_strided_slice %85 {offsets = [0, 0], sizes = [32, 96], strides = [1, 1]} : vector<32x128xbf16> to vector<32x96xbf16>
    %87 = vector.extract_strided_slice %85 {offsets = [0, 96], sizes = [32, 32], strides = [1, 1]} : vector<32x128xbf16> to vector<32x32xbf16>
    %c0_36 = arith.constant 0 : index
    %c0_37 = arith.constant 0 : index
    %c0_38 = arith.constant 0 : index
    %88 = vector.load %arg4[%c0_36, %c0_37, %c0_38] : memref<2x32x64xbf16, #tpu.memory_space<vmem>>, vector<1x32x64xbf16>
    %89 = vector.shape_cast %88 : vector<1x32x64xbf16> to vector<32x64xbf16>
    %c0_39 = arith.constant 0 : index
    %c0_40 = arith.constant 0 : index
    %c0_41 = arith.constant 0 : index
    %90 = vector.load %arg5[%c0_39, %c0_40, %c0_41] : memref<2x64x32xbf16, #tpu.memory_space<vmem>>, vector<1x64x32xbf16>
    %91 = vector.shape_cast %90 : vector<1x64x32xbf16> to vector<64x32xbf16>
    %92 = vector.extract_strided_slice %0 {offsets = [4, 0], sizes = [1, 32], strides = [1, 1]} : vector<24x128xf32> to vector<1x32xf32>
    %93 = vector.extract_strided_slice %0 {offsets = [5, 0], sizes = [1, 32], strides = [1, 1]} : vector<24x128xf32> to vector<1x32xf32>
    %cst_42 = arith.constant dense<0.000000e+00> : vector<32xf32>
    %94 = vector.multi_reduction <add>, %71, %cst_42 [1] : vector<32x32xf32> to vector<32xf32>
    %95 = vector.shape_cast %94 : vector<32xf32> to vector<32x1xf32>
    %cst_43 = arith.constant 3.200000e+01 : f32
    %96 = vector.broadcast %cst_43 : f32 to vector<32x1xf32>
    %97 = arith.divf %95, %96 : vector<32x1xf32>
    %98 = arith.mulf %71, %71 : vector<32x32xf32>
    %cst_44 = arith.constant dense<0.000000e+00> : vector<32xf32>
    %99 = vector.multi_reduction <add>, %98, %cst_44 [1] : vector<32x32xf32> to vector<32xf32>
    %100 = vector.shape_cast %99 : vector<32xf32> to vector<32x1xf32>
    %cst_45 = arith.constant 3.200000e+01 : f32
    %101 = vector.broadcast %cst_45 : f32 to vector<32x1xf32>
    %102 = arith.divf %100, %101 : vector<32x1xf32>
    %103 = arith.mulf %97, %97 : vector<32x1xf32>
    %104 = arith.subf %102, %103 : vector<32x1xf32>
    %105 = vector.broadcast %97 : vector<32x1xf32> to vector<32x32xf32>
    %106 = arith.subf %71, %105 : vector<32x32xf32>
    %cst_46 = arith.constant 9.99999974E-6 : f32
    %107 = vector.broadcast %cst_46 : f32 to vector<32x1xf32>
    %108 = arith.addf %104, %107 : vector<32x1xf32>
    %109 = math.rsqrt %108 : vector<32x1xf32>
    %110 = vector.broadcast %109 : vector<32x1xf32> to vector<32x32xf32>
    %111 = arith.mulf %106, %110 : vector<32x32xf32>
    %112 = vector.broadcast %92 : vector<1x32xf32> to vector<32x32xf32>
    %113 = arith.mulf %111, %112 : vector<32x32xf32>
    %114 = vector.broadcast %93 : vector<1x32xf32> to vector<32x32xf32>
    %115 = arith.addf %113, %114 : vector<32x32xf32>
    %116 = arith.truncf %115 : vector<32x32xf32> to vector<32x32xbf16>
    %cst_47 = arith.constant dense<0.000000e+00> : vector<32x96xf32>
    %117 = tpu.matmul %116, %86, %cst_47 {dimension_numbers = #tpu.dot_dimension_numbers<[1], [0], [0], [1], [0, 0, 1, 1], [], []>} : vector<32x32xbf16>, vector<32x96xbf16>, vector<32x96xf32> -> vector<32x96xf32>
    %118 = vector.extract_strided_slice %117 {offsets = [0, 0], sizes = [32, 32], strides = [1, 1]} : vector<32x96xf32> to vector<32x32xf32>
    %119 = arith.truncf %118 : vector<32x32xf32> to vector<32x32xbf16>
    %120 = vector.extract_strided_slice %117 {offsets = [0, 32], sizes = [32, 32], strides = [1, 1]} : vector<32x96xf32> to vector<32x32xf32>
    %121 = arith.truncf %120 : vector<32x32xf32> to vector<32x32xbf16>
    %122 = vector.extract_strided_slice %117 {offsets = [0, 64], sizes = [32, 32], strides = [1, 1]} : vector<32x96xf32> to vector<32x32xf32>
    %123 = arith.truncf %122 : vector<32x32xf32> to vector<32x32xbf16>
    %124 = vector.extract_strided_slice %119 {offsets = [0, 0], sizes = [16, 32], strides = [1, 1]} : vector<32x32xbf16> to vector<16x32xbf16>
    %125 = vector.extract_strided_slice %121 {offsets = [0, 0], sizes = [16, 32], strides = [1, 1]} : vector<32x32xbf16> to vector<16x32xbf16>
    "tpu.trace_start"() <{level = 10 : i32, message = "qd,kd->qk"}> : () -> ()
    %cst_48 = arith.constant dense<0.000000e+00> : vector<16x16xf32>
    %126 = tpu.matmul %124, %125, %cst_48 {dimension_numbers = #tpu.dot_dimension_numbers<[1], [1], [0], [0], [0, 0, 1, 0], [], []>} : vector<16x32xbf16>, vector<16x32xbf16>, vector<16x16xf32> -> vector<16x16xf32>
    "tpu.trace_stop"() : () -> ()
    %127 = vector.broadcast %77 : vector<1x16xf32> to vector<16x16xf32>
    %128 = arith.addf %126, %127 : vector<16x16xf32>
    %cst_49 = arith.constant dense<0xFF800000> : vector<16xf32>
    %129 = vector.multi_reduction <maximumf>, %128, %cst_49 [1] : vector<16x16xf32> to vector<16xf32>
    %130 = vector.shape_cast %129 : vector<16xf32> to vector<16x1xf32>
    %131 = vector.broadcast %130 : vector<16x1xf32> to vector<16x16xf32>
    %132 = arith.subf %128, %131 : vector<16x16xf32>
    %133 = math.exp %132 : vector<16x16xf32>
    %cst_50 = arith.constant dense<0.000000e+00> : vector<16xf32>
    %134 = vector.multi_reduction <add>, %133, %cst_50 [1] : vector<16x16xf32> to vector<16xf32>
    %135 = vector.shape_cast %134 : vector<16xf32> to vector<16x1xf32>
    %136 = tpu.reciprocal %135 {approx = true} : vector<16x1xf32> -> vector<16x1xf32>
    %137 = vector.broadcast %136 : vector<16x1xf32> to vector<16x16xf32>
    %138 = arith.mulf %133, %137 : vector<16x16xf32>
    %139 = arith.truncf %138 : vector<16x16xf32> to vector<16x16xbf16>
    %140 = vector.extract_strided_slice %123 {offsets = [0, 0], sizes = [16, 32], strides = [1, 1]} : vector<32x32xbf16> to vector<16x32xbf16>
    %cst_51 = arith.constant dense<0.000000e+00> : vector<16x32xf32>
    %141 = tpu.matmul %139, %140, %cst_51 {dimension_numbers = #tpu.dot_dimension_numbers<[1], [0], [0], [1], [0, 0, 1, 1], [], []>} : vector<16x16xbf16>, vector<16x32xbf16>, vector<16x32xf32> -> vector<16x32xf32>
    %142 = vector.extract_strided_slice %119 {offsets = [16, 0], sizes = [16, 32], strides = [1, 1]} : vector<32x32xbf16> to vector<16x32xbf16>
    %143 = vector.extract_strided_slice %121 {offsets = [16, 0], sizes = [16, 32], strides = [1, 1]} : vector<32x32xbf16> to vector<16x32xbf16>
    "tpu.trace_start"() <{level = 10 : i32, message = "qd,kd->qk"}> : () -> ()
    %cst_52 = arith.constant dense<0.000000e+00> : vector<16x16xf32>
    %144 = tpu.matmul %142, %143, %cst_52 {dimension_numbers = #tpu.dot_dimension_numbers<[1], [1], [0], [0], [0, 0, 1, 0], [], []>} : vector<16x32xbf16>, vector<16x32xbf16>, vector<16x16xf32> -> vector<16x16xf32>
    "tpu.trace_stop"() : () -> ()
    %145 = vector.broadcast %83 : vector<1x16xf32> to vector<16x16xf32>
    %146 = arith.addf %144, %145 : vector<16x16xf32>
    %cst_53 = arith.constant dense<0xFF800000> : vector<16xf32>
    %147 = vector.multi_reduction <maximumf>, %146, %cst_53 [1] : vector<16x16xf32> to vector<16xf32>
    %148 = vector.shape_cast %147 : vector<16xf32> to vector<16x1xf32>
    %149 = vector.broadcast %148 : vector<16x1xf32> to vector<16x16xf32>
    %150 = arith.subf %146, %149 : vector<16x16xf32>
    %151 = math.exp %150 : vector<16x16xf32>
    %cst_54 = arith.constant dense<0.000000e+00> : vector<16xf32>
    %152 = vector.multi_reduction <add>, %151, %cst_54 [1] : vector<16x16xf32> to vector<16xf32>
    %153 = vector.shape_cast %152 : vector<16xf32> to vector<16x1xf32>
    %154 = tpu.reciprocal %153 {approx = true} : vector<16x1xf32> -> vector<16x1xf32>
    %155 = vector.broadcast %154 : vector<16x1xf32> to vector<16x16xf32>
    %156 = arith.mulf %151, %155 : vector<16x16xf32>
    %157 = arith.truncf %156 : vector<16x16xf32> to vector<16x16xbf16>
    %158 = vector.extract_strided_slice %123 {offsets = [16, 0], sizes = [16, 32], strides = [1, 1]} : vector<32x32xbf16> to vector<16x32xbf16>
    %cst_55 = arith.constant dense<0.000000e+00> : vector<16x32xf32>
    %159 = tpu.matmul %157, %158, %cst_55 {dimension_numbers = #tpu.dot_dimension_numbers<[1], [0], [0], [1], [0, 0, 1, 1], [], []>} : vector<16x16xbf16>, vector<16x32xbf16>, vector<16x32xf32> -> vector<16x32xf32>
    %160 = tpu.concatenate %141, %159 in 0 : vector<16x32xf32>, vector<16x32xf32> -> vector<32x32xf32>
    %161 = arith.truncf %160 : vector<32x32xf32> to vector<32x32xbf16>
    %cst_56 = arith.constant dense<0.000000e+00> : vector<32x32xf32>
    %162 = tpu.matmul %161, %87, %cst_56 {dimension_numbers = #tpu.dot_dimension_numbers<[1], [0], [0], [1], [0, 0, 1, 1], [], []>} : vector<32x32xbf16>, vector<32x32xbf16>, vector<32x32xf32> -> vector<32x32xf32>
    %163 = arith.addf %71, %162 : vector<32x32xf32>
    %164 = vector.extract_strided_slice %0 {offsets = [6, 0], sizes = [1, 32], strides = [1, 1]} : vector<24x128xf32> to vector<1x32xf32>
    %165 = vector.extract_strided_slice %0 {offsets = [7, 0], sizes = [1, 32], strides = [1, 1]} : vector<24x128xf32> to vector<1x32xf32>
    %cst_57 = arith.constant dense<0.000000e+00> : vector<32xf32>
    %166 = vector.multi_reduction <add>, %163, %cst_57 [1] : vector<32x32xf32> to vector<32xf32>
    %167 = vector.shape_cast %166 : vector<32xf32> to vector<32x1xf32>
    %cst_58 = arith.constant 3.200000e+01 : f32
    %168 = vector.broadcast %cst_58 : f32 to vector<32x1xf32>
    %169 = arith.divf %167, %168 : vector<32x1xf32>
    %170 = arith.mulf %163, %163 : vector<32x32xf32>
    %cst_59 = arith.constant dense<0.000000e+00> : vector<32xf32>
    %171 = vector.multi_reduction <add>, %170, %cst_59 [1] : vector<32x32xf32> to vector<32xf32>
    %172 = vector.shape_cast %171 : vector<32xf32> to vector<32x1xf32>
    %cst_60 = arith.constant 3.200000e+01 : f32
    %173 = vector.broadcast %cst_60 : f32 to vector<32x1xf32>
    %174 = arith.divf %172, %173 : vector<32x1xf32>
    %175 = arith.mulf %169, %169 : vector<32x1xf32>
    %176 = arith.subf %174, %175 : vector<32x1xf32>
    %177 = vector.broadcast %169 : vector<32x1xf32> to vector<32x32xf32>
    %178 = arith.subf %163, %177 : vector<32x32xf32>
    %cst_61 = arith.constant 9.99999974E-6 : f32
    %179 = vector.broadcast %cst_61 : f32 to vector<32x1xf32>
    %180 = arith.addf %176, %179 : vector<32x1xf32>
    %181 = math.rsqrt %180 : vector<32x1xf32>
    %182 = vector.broadcast %181 : vector<32x1xf32> to vector<32x32xf32>
    %183 = arith.mulf %178, %182 : vector<32x32xf32>
    %184 = vector.broadcast %164 : vector<1x32xf32> to vector<32x32xf32>
    %185 = arith.mulf %183, %184 : vector<32x32xf32>
    %186 = vector.broadcast %165 : vector<1x32xf32> to vector<32x32xf32>
    %187 = arith.addf %185, %186 : vector<32x32xf32>
    %188 = arith.truncf %187 : vector<32x32xf32> to vector<32x32xbf16>
    %cst_62 = arith.constant dense<0.000000e+00> : vector<32x64xf32>
    %189 = tpu.matmul %188, %89, %cst_62 {dimension_numbers = #tpu.dot_dimension_numbers<[1], [0], [0], [1], [0, 0, 1, 1], [], []>} : vector<32x32xbf16>, vector<32x64xbf16>, vector<32x64xf32> -> vector<32x64xf32>
    %190 = vector.extract_strided_slice %0 {offsets = [8, 0], sizes = [1, 64], strides = [1, 1]} : vector<24x128xf32> to vector<1x64xf32>
    %191 = vector.broadcast %190 : vector<1x64xf32> to vector<32x64xf32>
    %192 = arith.addf %189, %191 : vector<32x64xf32>
    %193 = arith.mulf %192, %192 : vector<32x64xf32>
    %194 = arith.mulf %192, %193 : vector<32x64xf32>
    %cst_63 = arith.constant 4.471500e-02 : f32
    %195 = vector.broadcast %cst_63 : f32 to vector<32x64xf32>
    %196 = arith.mulf %195, %194 : vector<32x64xf32>
    %197 = arith.addf %192, %196 : vector<32x64xf32>
    %cst_64 = arith.constant 0.797884583 : f32
    %198 = vector.broadcast %cst_64 : f32 to vector<32x64xf32>
    %199 = arith.mulf %198, %197 : vector<32x64xf32>
    %200 = math.tanh %199 : vector<32x64xf32>
    %cst_65 = arith.constant 1.000000e+00 : f32
    %201 = vector.broadcast %cst_65 : f32 to vector<32x64xf32>
    %202 = arith.addf %201, %200 : vector<32x64xf32>
    %cst_66 = arith.constant 5.000000e-01 : f32
    %203 = vector.broadcast %cst_66 : f32 to vector<32x64xf32>
    %204 = arith.mulf %203, %202 : vector<32x64xf32>
    %205 = arith.mulf %192, %204 : vector<32x64xf32>
    %206 = arith.truncf %205 : vector<32x64xf32> to vector<32x64xbf16>
    %cst_67 = arith.constant dense<0.000000e+00> : vector<32x32xf32>
    %207 = tpu.matmul %206, %91, %cst_67 {dimension_numbers = #tpu.dot_dimension_numbers<[1], [0], [0], [1], [0, 0, 1, 1], [], []>} : vector<32x64xbf16>, vector<64x32xbf16>, vector<32x32xf32> -> vector<32x32xf32>
    %208 = arith.addf %163, %207 : vector<32x32xf32>
    %209 = vector.extract_strided_slice %0 {offsets = [9, 0], sizes = [1, 32], strides = [1, 1]} : vector<24x128xf32> to vector<1x32xf32>
    %210 = vector.broadcast %209 : vector<1x32xf32> to vector<32x32xf32>
    %211 = arith.addf %208, %210 : vector<32x32xf32>
    %c1_68 = arith.constant 1 : index
    %c0_69 = arith.constant 0 : index
    %c0_70 = arith.constant 0 : index
    %212 = vector.load %arg3[%c1_68, %c0_69, %c0_70] : memref<3x32x128xbf16, #tpu.memory_space<vmem>>, vector<1x32x128xbf16>
    %213 = vector.shape_cast %212 : vector<1x32x128xbf16> to vector<32x128xbf16>
    %214 = vector.extract_strided_slice %213 {offsets = [0, 0], sizes = [32, 96], strides = [1, 1]} : vector<32x128xbf16> to vector<32x96xbf16>
    %215 = vector.extract_strided_slice %213 {offsets = [0, 96], sizes = [32, 32], strides = [1, 1]} : vector<32x128xbf16> to vector<32x32xbf16>
    %c1_71 = arith.constant 1 : index
    %c0_72 = arith.constant 0 : index
    %c0_73 = arith.constant 0 : index
    %216 = vector.load %arg4[%c1_71, %c0_72, %c0_73] : memref<2x32x64xbf16, #tpu.memory_space<vmem>>, vector<1x32x64xbf16>
    %217 = vector.shape_cast %216 : vector<1x32x64xbf16> to vector<32x64xbf16>
    %c1_74 = arith.constant 1 : index
    %c0_75 = arith.constant 0 : index
    %c0_76 = arith.constant 0 : index
    %218 = vector.load %arg5[%c1_74, %c0_75, %c0_76] : memref<2x64x32xbf16, #tpu.memory_space<vmem>>, vector<1x64x32xbf16>
    %219 = vector.shape_cast %218 : vector<1x64x32xbf16> to vector<64x32xbf16>
    %220 = vector.extract_strided_slice %0 {offsets = [10, 0], sizes = [1, 32], strides = [1, 1]} : vector<24x128xf32> to vector<1x32xf32>
    %221 = vector.extract_strided_slice %0 {offsets = [11, 0], sizes = [1, 32], strides = [1, 1]} : vector<24x128xf32> to vector<1x32xf32>
    %cst_77 = arith.constant dense<0.000000e+00> : vector<32xf32>
    %222 = vector.multi_reduction <add>, %211, %cst_77 [1] : vector<32x32xf32> to vector<32xf32>
    %223 = vector.shape_cast %222 : vector<32xf32> to vector<32x1xf32>
    %cst_78 = arith.constant 3.200000e+01 : f32
    %224 = vector.broadcast %cst_78 : f32 to vector<32x1xf32>
    %225 = arith.divf %223, %224 : vector<32x1xf32>
    %226 = arith.mulf %211, %211 : vector<32x32xf32>
    %cst_79 = arith.constant dense<0.000000e+00> : vector<32xf32>
    %227 = vector.multi_reduction <add>, %226, %cst_79 [1] : vector<32x32xf32> to vector<32xf32>
    %228 = vector.shape_cast %227 : vector<32xf32> to vector<32x1xf32>
    %cst_80 = arith.constant 3.200000e+01 : f32
    %229 = vector.broadcast %cst_80 : f32 to vector<32x1xf32>
    %230 = arith.divf %228, %229 : vector<32x1xf32>
    %231 = arith.mulf %225, %225 : vector<32x1xf32>
    %232 = arith.subf %230, %231 : vector<32x1xf32>
    %233 = vector.broadcast %225 : vector<32x1xf32> to vector<32x32xf32>
    %234 = arith.subf %211, %233 : vector<32x32xf32>
    %cst_81 = arith.constant 9.99999974E-6 : f32
    %235 = vector.broadcast %cst_81 : f32 to vector<32x1xf32>
    %236 = arith.addf %232, %235 : vector<32x1xf32>
    %237 = math.rsqrt %236 : vector<32x1xf32>
    %238 = vector.broadcast %237 : vector<32x1xf32> to vector<32x32xf32>
    %239 = arith.mulf %234, %238 : vector<32x32xf32>
    %240 = vector.broadcast %220 : vector<1x32xf32> to vector<32x32xf32>
    %241 = arith.mulf %239, %240 : vector<32x32xf32>
    %242 = vector.broadcast %221 : vector<1x32xf32> to vector<32x32xf32>
    %243 = arith.addf %241, %242 : vector<32x32xf32>
    %244 = arith.truncf %243 : vector<32x32xf32> to vector<32x32xbf16>
    %cst_82 = arith.constant dense<0.000000e+00> : vector<32x96xf32>
    %245 = tpu.matmul %244, %214, %cst_82 {dimension_numbers = #tpu.dot_dimension_numbers<[1], [0], [0], [1], [0, 0, 1, 1], [], []>} : vector<32x32xbf16>, vector<32x96xbf16>, vector<32x96xf32> -> vector<32x96xf32>
    %246 = vector.extract_strided_slice %245 {offsets = [0, 0], sizes = [32, 32], strides = [1, 1]} : vector<32x96xf32> to vector<32x32xf32>
    %247 = arith.truncf %246 : vector<32x32xf32> to vector<32x32xbf16>
    %248 = vector.extract_strided_slice %245 {offsets = [0, 32], sizes = [32, 32], strides = [1, 1]} : vector<32x96xf32> to vector<32x32xf32>
    %249 = arith.truncf %248 : vector<32x32xf32> to vector<32x32xbf16>
    %250 = vector.extract_strided_slice %245 {offsets = [0, 64], sizes = [32, 32], strides = [1, 1]} : vector<32x96xf32> to vector<32x32xf32>
    %251 = arith.truncf %250 : vector<32x32xf32> to vector<32x32xbf16>
    %252 = vector.extract_strided_slice %247 {offsets = [0, 0], sizes = [16, 32], strides = [1, 1]} : vector<32x32xbf16> to vector<16x32xbf16>
    %253 = vector.extract_strided_slice %249 {offsets = [0, 0], sizes = [16, 32], strides = [1, 1]} : vector<32x32xbf16> to vector<16x32xbf16>
    "tpu.trace_start"() <{level = 10 : i32, message = "qd,kd->qk"}> : () -> ()
    %cst_83 = arith.constant dense<0.000000e+00> : vector<16x16xf32>
    %254 = tpu.matmul %252, %253, %cst_83 {dimension_numbers = #tpu.dot_dimension_numbers<[1], [1], [0], [0], [0, 0, 1, 0], [], []>} : vector<16x32xbf16>, vector<16x32xbf16>, vector<16x16xf32> -> vector<16x16xf32>
    "tpu.trace_stop"() : () -> ()
    %255 = vector.broadcast %77 : vector<1x16xf32> to vector<16x16xf32>
    %256 = arith.addf %254, %255 : vector<16x16xf32>
    %cst_84 = arith.constant dense<0xFF800000> : vector<16xf32>
    %257 = vector.multi_reduction <maximumf>, %256, %cst_84 [1] : vector<16x16xf32> to vector<16xf32>
    %258 = vector.shape_cast %257 : vector<16xf32> to vector<16x1xf32>
    %259 = vector.broadcast %258 : vector<16x1xf32> to vector<16x16xf32>
    %260 = arith.subf %256, %259 : vector<16x16xf32>
    %261 = math.exp %260 : vector<16x16xf32>
    %cst_85 = arith.constant dense<0.000000e+00> : vector<16xf32>
    %262 = vector.multi_reduction <add>, %261, %cst_85 [1] : vector<16x16xf32> to vector<16xf32>
    %263 = vector.shape_cast %262 : vector<16xf32> to vector<16x1xf32>
    %264 = tpu.reciprocal %263 {approx = true} : vector<16x1xf32> -> vector<16x1xf32>
    %265 = vector.broadcast %264 : vector<16x1xf32> to vector<16x16xf32>
    %266 = arith.mulf %261, %265 : vector<16x16xf32>
    %267 = arith.truncf %266 : vector<16x16xf32> to vector<16x16xbf16>
    %268 = vector.extract_strided_slice %251 {offsets = [0, 0], sizes = [16, 32], strides = [1, 1]} : vector<32x32xbf16> to vector<16x32xbf16>
    %cst_86 = arith.constant dense<0.000000e+00> : vector<16x32xf32>
    %269 = tpu.matmul %267, %268, %cst_86 {dimension_numbers = #tpu.dot_dimension_numbers<[1], [0], [0], [1], [0, 0, 1, 1], [], []>} : vector<16x16xbf16>, vector<16x32xbf16>, vector<16x32xf32> -> vector<16x32xf32>
    %270 = vector.extract_strided_slice %247 {offsets = [16, 0], sizes = [16, 32], strides = [1, 1]} : vector<32x32xbf16> to vector<16x32xbf16>
    %271 = vector.extract_strided_slice %249 {offsets = [16, 0], sizes = [16, 32], strides = [1, 1]} : vector<32x32xbf16> to vector<16x32xbf16>
    "tpu.trace_start"() <{level = 10 : i32, message = "qd,kd->qk"}> : () -> ()
    %cst_87 = arith.constant dense<0.000000e+00> : vector<16x16xf32>
    %272 = tpu.matmul %270, %271, %cst_87 {dimension_numbers = #tpu.dot_dimension_numbers<[1], [1], [0], [0], [0, 0, 1, 0], [], []>} : vector<16x32xbf16>, vector<16x32xbf16>, vector<16x16xf32> -> vector<16x16xf32>
    "tpu.trace_stop"() : () -> ()
    %273 = vector.broadcast %83 : vector<1x16xf32> to vector<16x16xf32>
    %274 = arith.addf %272, %273 : vector<16x16xf32>
    %cst_88 = arith.constant dense<0xFF800000> : vector<16xf32>
    %275 = vector.multi_reduction <maximumf>, %274, %cst_88 [1] : vector<16x16xf32> to vector<16xf32>
    %276 = vector.shape_cast %275 : vector<16xf32> to vector<16x1xf32>
    %277 = vector.broadcast %276 : vector<16x1xf32> to vector<16x16xf32>
    %278 = arith.subf %274, %277 : vector<16x16xf32>
    %279 = math.exp %278 : vector<16x16xf32>
    %cst_89 = arith.constant dense<0.000000e+00> : vector<16xf32>
    %280 = vector.multi_reduction <add>, %279, %cst_89 [1] : vector<16x16xf32> to vector<16xf32>
    %281 = vector.shape_cast %280 : vector<16xf32> to vector<16x1xf32>
    %282 = tpu.reciprocal %281 {approx = true} : vector<16x1xf32> -> vector<16x1xf32>
    %283 = vector.broadcast %282 : vector<16x1xf32> to vector<16x16xf32>
    %284 = arith.mulf %279, %283 : vector<16x16xf32>
    %285 = arith.truncf %284 : vector<16x16xf32> to vector<16x16xbf16>
    %286 = vector.extract_strided_slice %251 {offsets = [16, 0], sizes = [16, 32], strides = [1, 1]} : vector<32x32xbf16> to vector<16x32xbf16>
    %cst_90 = arith.constant dense<0.000000e+00> : vector<16x32xf32>
    %287 = tpu.matmul %285, %286, %cst_90 {dimension_numbers = #tpu.dot_dimension_numbers<[1], [0], [0], [1], [0, 0, 1, 1], [], []>} : vector<16x16xbf16>, vector<16x32xbf16>, vector<16x32xf32> -> vector<16x32xf32>
    %288 = tpu.concatenate %269, %287 in 0 : vector<16x32xf32>, vector<16x32xf32> -> vector<32x32xf32>
    %289 = arith.truncf %288 : vector<32x32xf32> to vector<32x32xbf16>
    %cst_91 = arith.constant dense<0.000000e+00> : vector<32x32xf32>
    %290 = tpu.matmul %289, %215, %cst_91 {dimension_numbers = #tpu.dot_dimension_numbers<[1], [0], [0], [1], [0, 0, 1, 1], [], []>} : vector<32x32xbf16>, vector<32x32xbf16>, vector<32x32xf32> -> vector<32x32xf32>
    %291 = arith.addf %211, %290 : vector<32x32xf32>
    %292 = vector.extract_strided_slice %0 {offsets = [12, 0], sizes = [1, 32], strides = [1, 1]} : vector<24x128xf32> to vector<1x32xf32>
    %293 = vector.extract_strided_slice %0 {offsets = [13, 0], sizes = [1, 32], strides = [1, 1]} : vector<24x128xf32> to vector<1x32xf32>
    %cst_92 = arith.constant dense<0.000000e+00> : vector<32xf32>
    %294 = vector.multi_reduction <add>, %291, %cst_92 [1] : vector<32x32xf32> to vector<32xf32>
    %295 = vector.shape_cast %294 : vector<32xf32> to vector<32x1xf32>
    %cst_93 = arith.constant 3.200000e+01 : f32
    %296 = vector.broadcast %cst_93 : f32 to vector<32x1xf32>
    %297 = arith.divf %295, %296 : vector<32x1xf32>
    %298 = arith.mulf %291, %291 : vector<32x32xf32>
    %cst_94 = arith.constant dense<0.000000e+00> : vector<32xf32>
    %299 = vector.multi_reduction <add>, %298, %cst_94 [1] : vector<32x32xf32> to vector<32xf32>
    %300 = vector.shape_cast %299 : vector<32xf32> to vector<32x1xf32>
    %cst_95 = arith.constant 3.200000e+01 : f32
    %301 = vector.broadcast %cst_95 : f32 to vector<32x1xf32>
    %302 = arith.divf %300, %301 : vector<32x1xf32>
    %303 = arith.mulf %297, %297 : vector<32x1xf32>
    %304 = arith.subf %302, %303 : vector<32x1xf32>
    %305 = vector.broadcast %297 : vector<32x1xf32> to vector<32x32xf32>
    %306 = arith.subf %291, %305 : vector<32x32xf32>
    %cst_96 = arith.constant 9.99999974E-6 : f32
    %307 = vector.broadcast %cst_96 : f32 to vector<32x1xf32>
    %308 = arith.addf %304, %307 : vector<32x1xf32>
    %309 = math.rsqrt %308 : vector<32x1xf32>
    %310 = vector.broadcast %309 : vector<32x1xf32> to vector<32x32xf32>
    %311 = arith.mulf %306, %310 : vector<32x32xf32>
    %312 = vector.broadcast %292 : vector<1x32xf32> to vector<32x32xf32>
    %313 = arith.mulf %311, %312 : vector<32x32xf32>
    %314 = vector.broadcast %293 : vector<1x32xf32> to vector<32x32xf32>
    %315 = arith.addf %313, %314 : vector<32x32xf32>
    %316 = arith.truncf %315 : vector<32x32xf32> to vector<32x32xbf16>
    %cst_97 = arith.constant dense<0.000000e+00> : vector<32x64xf32>
    %317 = tpu.matmul %316, %217, %cst_97 {dimension_numbers = #tpu.dot_dimension_numbers<[1], [0], [0], [1], [0, 0, 1, 1], [], []>} : vector<32x32xbf16>, vector<32x64xbf16>, vector<32x64xf32> -> vector<32x64xf32>
    %318 = vector.extract_strided_slice %0 {offsets = [14, 0], sizes = [1, 64], strides = [1, 1]} : vector<24x128xf32> to vector<1x64xf32>
    %319 = vector.broadcast %318 : vector<1x64xf32> to vector<32x64xf32>
    %320 = arith.addf %317, %319 : vector<32x64xf32>
    %321 = arith.mulf %320, %320 : vector<32x64xf32>
    %322 = arith.mulf %320, %321 : vector<32x64xf32>
    %cst_98 = arith.constant 4.471500e-02 : f32
    %323 = vector.broadcast %cst_98 : f32 to vector<32x64xf32>
    %324 = arith.mulf %323, %322 : vector<32x64xf32>
    %325 = arith.addf %320, %324 : vector<32x64xf32>
    %cst_99 = arith.constant 0.797884583 : f32
    %326 = vector.broadcast %cst_99 : f32 to vector<32x64xf32>
    %327 = arith.mulf %326, %325 : vector<32x64xf32>
    %328 = math.tanh %327 : vector<32x64xf32>
    %cst_100 = arith.constant 1.000000e+00 : f32
    %329 = vector.broadcast %cst_100 : f32 to vector<32x64xf32>
    %330 = arith.addf %329, %328 : vector<32x64xf32>
    %cst_101 = arith.constant 5.000000e-01 : f32
    %331 = vector.broadcast %cst_101 : f32 to vector<32x64xf32>
    %332 = arith.mulf %331, %330 : vector<32x64xf32>
    %333 = arith.mulf %320, %332 : vector<32x64xf32>
    %334 = arith.truncf %333 : vector<32x64xf32> to vector<32x64xbf16>
    %cst_102 = arith.constant dense<0.000000e+00> : vector<32x32xf32>
    %335 = tpu.matmul %334, %219, %cst_102 {dimension_numbers = #tpu.dot_dimension_numbers<[1], [0], [0], [1], [0, 0, 1, 1], [], []>} : vector<32x64xbf16>, vector<64x32xbf16>, vector<32x32xf32> -> vector<32x32xf32>
    %336 = arith.addf %291, %335 : vector<32x32xf32>
    %337 = vector.extract_strided_slice %0 {offsets = [15, 0], sizes = [1, 32], strides = [1, 1]} : vector<24x128xf32> to vector<1x32xf32>
    %338 = vector.broadcast %337 : vector<1x32xf32> to vector<32x32xf32>
    %339 = arith.addf %336, %338 : vector<32x32xf32>
    %340 = vector.extract_strided_slice %0 {offsets = [16, 0], sizes = [1, 32], strides = [1, 1]} : vector<24x128xf32> to vector<1x32xf32>
    %341 = vector.extract_strided_slice %0 {offsets = [17, 0], sizes = [1, 32], strides = [1, 1]} : vector<24x128xf32> to vector<1x32xf32>
    %cst_103 = arith.constant dense<0.000000e+00> : vector<32xf32>
    %342 = vector.multi_reduction <add>, %339, %cst_103 [1] : vector<32x32xf32> to vector<32xf32>
    %343 = vector.shape_cast %342 : vector<32xf32> to vector<32x1xf32>
    %cst_104 = arith.constant 3.200000e+01 : f32
    %344 = vector.broadcast %cst_104 : f32 to vector<32x1xf32>
    %345 = arith.divf %343, %344 : vector<32x1xf32>
    %346 = arith.mulf %339, %339 : vector<32x32xf32>
    %cst_105 = arith.constant dense<0.000000e+00> : vector<32xf32>
    %347 = vector.multi_reduction <add>, %346, %cst_105 [1] : vector<32x32xf32> to vector<32xf32>
    %348 = vector.shape_cast %347 : vector<32xf32> to vector<32x1xf32>
    %cst_106 = arith.constant 3.200000e+01 : f32
    %349 = vector.broadcast %cst_106 : f32 to vector<32x1xf32>
    %350 = arith.divf %348, %349 : vector<32x1xf32>
    %351 = arith.mulf %345, %345 : vector<32x1xf32>
    %352 = arith.subf %350, %351 : vector<32x1xf32>
    %353 = vector.broadcast %345 : vector<32x1xf32> to vector<32x32xf32>
    %354 = arith.subf %339, %353 : vector<32x32xf32>
    %cst_107 = arith.constant 9.99999974E-6 : f32
    %355 = vector.broadcast %cst_107 : f32 to vector<32x1xf32>
    %356 = arith.addf %352, %355 : vector<32x1xf32>
    %357 = math.rsqrt %356 : vector<32x1xf32>
    %358 = vector.broadcast %357 : vector<32x1xf32> to vector<32x32xf32>
    %359 = arith.mulf %354, %358 : vector<32x32xf32>
    %360 = vector.broadcast %340 : vector<1x32xf32> to vector<32x32xf32>
    %361 = arith.mulf %359, %360 : vector<32x32xf32>
    %362 = vector.broadcast %341 : vector<1x32xf32> to vector<32x32xf32>
    %363 = arith.addf %361, %362 : vector<32x32xf32>
    %364 = arith.truncf %363 : vector<32x32xf32> to vector<32x32xbf16>
    %c2 = arith.constant 2 : index
    %c0_108 = arith.constant 0 : index
    %c0_109 = arith.constant 0 : index
    %365 = vector.load %arg3[%c2, %c0_108, %c0_109] : memref<3x32x128xbf16, #tpu.memory_space<vmem>>, vector<1x32x128xbf16>
    %366 = vector.shape_cast %365 : vector<1x32x128xbf16> to vector<32x128xbf16>
    %cst_110 = arith.constant dense<0.000000e+00> : vector<32x128xf32>
    %367 = tpu.matmul %364, %366, %cst_110 {dimension_numbers = #tpu.dot_dimension_numbers<[1], [0], [0], [1], [0, 0, 1, 1], [], []>} : vector<32x32xbf16>, vector<32x128xbf16>, vector<32x128xf32> -> vector<32x128xf32>
    %368 = vector.extract_strided_slice %0 {offsets = [18, 0], sizes = [1, 128], strides = [1, 1]} : vector<24x128xf32> to vector<1x128xf32>
    %369 = vector.broadcast %368 : vector<1x128xf32> to vector<32x128xf32>
    %370 = arith.addf %367, %369 : vector<32x128xf32>
    %c0_111 = arith.constant 0 : index
    %c0_112 = arith.constant 0 : index
    %371 = vector.load %arg7[%c0_111, %c0_112] : memref<32x128xf32, #tpu.memory_space<vmem>>, vector<32x128xf32>
    tpu.vector_store %arg7[%c0_111, %c0_112], %370 {strides = array<i32>} : memref<32x128xf32, #tpu.memory_space<vmem>>, vector<32x128xf32>,
    return
  }
  func.func @transform_0(%arg0: i32) -> (i32, i32) {
    %c0_i32 = arith.constant 0 : i32
    %c0_i32_0 = arith.constant 0 : i32
    return %arg0, %c0_i32 : i32, i32
  }
  func.func @transform_1(%arg0: i32) -> (i32, i32, i32) {
    %c0_i32 = arith.constant 0 : i32
    %c0_i32_0 = arith.constant 0 : i32
    %c0_i32_1 = arith.constant 0 : i32
    return %arg0, %c0_i32, %c0_i32_0 : i32, i32, i32
  }
  func.func @transform_2(%arg0: i32) -> (i32, i32, i32) {
    %c0_i32 = arith.constant 0 : i32
    %c0_i32_0 = arith.constant 0 : i32
    %c0_i32_1 = arith.constant 0 : i32
    %c0_i32_2 = arith.constant 0 : i32
    return %c0_i32, %c0_i32_0, %c0_i32_1 : i32, i32, i32
  }
  func.func @transform_3(%arg0: i32) -> (i32, i32, i32) {
    %c0_i32 = arith.constant 0 : i32
    %c0_i32_0 = arith.constant 0 : i32
    %c0_i32_1 = arith.constant 0 : i32
    %c0_i32_2 = arith.constant 0 : i32
    return %c0_i32, %c0_i32_0, %c0_i32_1 : i32, i32, i32
  }
  func.func @transform_4(%arg0: i32) -> (i32, i32, i32) {
    %c0_i32 = arith.constant 0 : i32
    %c0_i32_0 = arith.constant 0 : i32
    %c0_i32_1 = arith.constant 0 : i32
    %c0_i32_2 = arith.constant 0 : i32
    return %c0_i32, %c0_i32_0, %c0_i32_1 : i32, i32, i32
  }
  func.func @transform_5(%arg0: i32) -> (i32, i32) {
    %c0_i32 = arith.constant 0 : i32
    %c0_i32_0 = arith.constant 0 : i32
    %c0_i32_1 = arith.constant 0 : i32
    return %c0_i32, %c0_i32_0 : i32, i32
  }
  func.func @transform_6(%arg0: i32) -> (i32, i32) {
    %c0_i32 = arith.constant 0 : i32
    %c0_i32_0 = arith.constant 0 : i32
    return %arg0, %c0_i32 : i32, i32
  }
}

</mosaic_0001>

<llo_original>
// kernel: bio2token_decoder.1
$region0: #{bio2token_decoder.1}
  #allocation0 [shape = 'u32[]', space=smem, size = 0x4, offset = 0x4, fixed_abs, tag = 'smem constant byte address 0x4 - core index']
  #allocation1 [shape = 'u32[144,128]{1,0:T(1,128)}', space=vmem, size = 0x12000, scoped, tag = 'internal scratch']
  %s0 = inlined_call_operand.vmem [shape: f32[32,1], index: 0, kind: input, shape index: {}]
  %s1 = inlined_call_operand.vmem [shape: f32[2,1,16], index: 1, kind: input, shape index: {}]
  %s2 = inlined_call_operand.vmem [shape: bf16[3,32,128], index: 2, kind: input, shape index: {}]
  %s3 = inlined_call_operand.vmem [shape: bf16[2,32,64], index: 3, kind: input, shape index: {}]
  %s4 = inlined_call_operand.vmem [shape: bf16[2,64,32], index: 4, kind: input, shape index: {}]
  %s5 = inlined_call_operand.vmem [shape: f32[24,128], index: 5, kind: input, shape index: {}]
  %s6 = inlined_call_operand.vmem [shape: f32[32,128], index: 6, kind: output, shape index: {}]
  %s7 = sld [smem:[#allocation0]]
  $region34: #{bio2token_decoder.1} parent=0
    _
  %s9 = ssub.s32 1, %s7
  %s10 = scalar_select 0, %s9, %s7
  // Predicated region
  $region2: #{bio2token_decoder.1} parent=0 // pred_check
    _
  $region3: #{bio2token_decoder.1} parent=0 // pred_check_branch
    %12 = sbr.rel (0) target = $region5
  $region4: #{bio2token_decoder.1} parent=0 // pred_region
    _
  $region5: #{bio2token_decoder.1} parent=0 // pred_fallthru
    _
  // Predicated region
  $region6: #{bio2token_decoder.1} parent=0 // pred_check
    _
  $region7: #{bio2token_decoder.1} parent=0 // pred_check_branch
    %14 = sbr.rel (0) target = $region9
  $region8: #{bio2token_decoder.1} parent=0 // pred_region
    _
  $region9: #{bio2token_decoder.1} parent=0 // pred_fallthru
    _
  // Predicated region
  $region10: #{bio2token_decoder.1} parent=0 // pred_check
    _
  $region11: #{bio2token_decoder.1} parent=0 // pred_check_branch
    %16 = sbr.rel (0) target = $region13
  $region12: #{bio2token_decoder.1} parent=0 // pred_region
    _
  $region13: #{bio2token_decoder.1} parent=0 // pred_fallthru
    _
  // Predicated region
  $region14: #{bio2token_decoder.1} parent=0 // pred_check
    _
  $region15: #{bio2token_decoder.1} parent=0 // pred_check_branch
    %18 = sbr.rel (0) target = $region17
  $region16: #{bio2token_decoder.1} parent=0 // pred_region
    _
  $region17: #{bio2token_decoder.1} parent=0 // pred_fallthru
    _
  // Predicated region
  $region18: #{bio2token_decoder.1} parent=0 // pred_check
    _
  $region19: #{bio2token_decoder.1} parent=0 // pred_check_branch
    %20 = sbr.rel (0) target = $region21
  $region20: #{bio2token_decoder.1} parent=0 // pred_region
    _
  $region21: #{bio2token_decoder.1} parent=0 // pred_fallthru
    _
  // Predicated region
  $region22: #{bio2token_decoder.1} parent=0 // pred_check
    _
  $region23: #{bio2token_decoder.1} parent=0 // pred_check_branch
    %22 = sbr.rel (0) target = $region25
  $region24: #{bio2token_decoder.1} parent=0 // pred_region
    _
  $region25: #{bio2token_decoder.1} parent=0 // pred_fallthru
    _
  %v24 = vld [vmem:[%s5] sm:$0xff]
  %v25 = vld [vmem:[%s5 + $0x8] sm:$0xff]
  %v26 = vld [vmem:[%s5 + $0x10] sm:$0xff]
  %v27 = vld [vmem:[%s0] sm:$0xff]
  %v28 = vld [vmem:[%s0 + $0x8] sm:$0xff]
  %v29 = vld [vmem:[%s0 + $0x10] sm:$0xff]
  %v30 = vld [vmem:[%s0 + $0x18] sm:$0xff]
  %v31 = vlaneseq
  %v32 = vshrl.u32 %v31, 7
  %v33 = vsub.s32 3, %v32
  %v34 = vrot.slane %v24, %v33
  %v35 = vadd.f32 %v34, 0.0
  %v36 = vadd.f32 %v27, 0.001
  %v37 = vadd.f32 %v28, 0.001
  %v38 = vadd.f32 %v29, 0.001
  %v39 = vadd.f32 %v30, 0.001
  %v40 = vfloor.f32 %v36
  %v41 = vfloor.f32 %v37
  %v42 = vfloor.f32 %v38
  %v43 = vfloor.f32 %v39
  %v44 = vmul.f32 %v40, 0.125
  %v45 = vmul.f32 %v41, 0.125
  %v46 = vmul.f32 %v42, 0.125
  %v47 = vmul.f32 %v43, 0.125
  %v48 = vadd.f32 %v44, 0.001
  %v49 = vadd.f32 %v45, 0.001
  %v50 = vadd.f32 %v46, 0.001
  %v51 = vadd.f32 %v47, 0.001
  %v52 = vfloor.f32 %v48
  %v53 = vfloor.f32 %v49
  %v54 = vfloor.f32 %v50
  %v55 = vfloor.f32 %v51
  %v56 = vmul.f32 %v52, 8.0
  %v57 = vmul.f32 %v53, 8.0
  %v58 = vmul.f32 %v54, 8.0
  %v59 = vmul.f32 %v55, 8.0
  %v60 = vsub.f32 %v40, %v56
  %v61 = vsub.f32 %v41, %v57
  %v62 = vsub.f32 %v42, %v58
  %v63 = vsub.f32 %v43, %v59
  %v64 = vsub.f32 %v60, 4.0
  %v65 = vsub.f32 %v61, 4.0
  %v66 = vsub.f32 %v62, 4.0
  %v67 = vsub.f32 %v63, 4.0
  %v68 = vmul.f32 %v64, 0.25
  %v69 = vmul.f32 %v65, 0.25
  %v70 = vmul.f32 %v66, 0.25
  %v71 = vmul.f32 %v67, 0.25
  %73 = vset.pattern.permute.xlu0 0
  %74 = vperm.xlu0 %73, %v68
  %v75 = vpop.permute.xlu0 %74
  %78 = vset.pattern.permute.xlu0 0
  %79 = vperm.xlu0 %78, %v69
  %v80 = vpop.permute.xlu0 %79
  %83 = vset.pattern.permute.xlu0 0
  %84 = vperm.xlu0 %83, %v70
  %v85 = vpop.permute.xlu0 %84
  %88 = vset.pattern.permute.xlu0 0
  %89 = vperm.xlu0 %88, %v71
  %v90 = vpop.permute.xlu0 %89
  %v92 = vlaneseq
  %v93 = vshrl.u32 %v92, 7
  %v94 = vsub.s32 0, %v93
  %v95 = vrot.slane %v24, %v94
  %v96 = vmul.f32 %v75, %v95
  %v97 = vmul.f32 %v80, %v95
  %v98 = vmul.f32 %v85, %v95
  %v99 = vmul.f32 %v90, %v95
  %v100 = vadd.f32 %v35, %v96
  %v101 = vadd.f32 %v35, %v97
  %v102 = vadd.f32 %v35, %v98
  %v103 = vadd.f32 %v35, %v99
  %v104 = vmul.f32 %v27, 0.125
  %v105 = vmul.f32 %v28, 0.125
  %v106 = vmul.f32 %v29, 0.125
  %v107 = vmul.f32 %v30, 0.125
  %v108 = vadd.f32 %v104, 0.001
  %v109 = vadd.f32 %v105, 0.001
  %v110 = vadd.f32 %v106, 0.001
  %v111 = vadd.f32 %v107, 0.001
  %v112 = vfloor.f32 %v108
  %v113 = vfloor.f32 %v109
  %v114 = vfloor.f32 %v110
  %v115 = vfloor.f32 %v111
  %v116 = vmul.f32 %v112, 0.16666667
  %v117 = vmul.f32 %v113, 0.16666667
  %v118 = vmul.f32 %v114, 0.16666667
  %v119 = vmul.f32 %v115, 0.16666667
  %v120 = vadd.f32 %v116, 0.001
  %v121 = vadd.f32 %v117, 0.001
  %v122 = vadd.f32 %v118, 0.001
  %v123 = vadd.f32 %v119, 0.001
  %v124 = vfloor.f32 %v120
  %v125 = vfloor.f32 %v121
  %v126 = vfloor.f32 %v122
  %v127 = vfloor.f32 %v123
  %v128 = vmul.f32 %v124, 6.0
  %v129 = vmul.f32 %v125, 6.0
  %v130 = vmul.f32 %v126, 6.0
  %v131 = vmul.f32 %v127, 6.0
  %v132 = vsub.f32 %v112, %v128
  %v133 = vsub.f32 %v113, %v129
  %v134 = vsub.f32 %v114, %v130
  %v135 = vsub.f32 %v115, %v131
  %v136 = vsub.f32 %v132, 3.0
  %v137 = vsub.f32 %v133, 3.0
  %v138 = vsub.f32 %v134, 3.0
  %v139 = vsub.f32 %v135, 3.0
  %v140 = vmul.f32 %v136, 0.33333334
  %v141 = vmul.f32 %v137, 0.33333334
  %v142 = vmul.f32 %v138, 0.33333334
  %v143 = vmul.f32 %v139, 0.33333334
  %145 = vset.pattern.permute.xlu0 0
  %146 = vperm.xlu0 %145, %v140
  %v147 = vpop.permute.xlu0 %146
  %150 = vset.pattern.permute.xlu0 0
  %151 = vperm.xlu0 %150, %v141
  %v152 = vpop.permute.xlu0 %151
  %155 = vset.pattern.permute.xlu0 0
  %156 = vperm.xlu0 %155, %v142
  %v157 = vpop.permute.xlu0 %156
  %160 = vset.pattern.permute.xlu0 0
  %161 = vperm.xlu0 %160, %v143
  %v162 = vpop.permute.xlu0 %161
  %v164 = vlaneseq
  %v165 = vshrl.u32 %v164, 7
  %v166 = vsub.s32 1, %v165
  %v167 = vrot.slane %v24, %v166
  %v168 = vmul.f32 %v147, %v167
  %v169 = vmul.f32 %v152, %v167
  %v170 = vmul.f32 %v157, %v167
  %v171 = vmul.f32 %v162, %v167
  %v172 = vadd.f32 %v100, %v168
  %v173 = vadd.f32 %v101, %v169
  %v174 = vadd.f32 %v102, %v170
  %v175 = vadd.f32 %v103, %v171
  %v176 = vmul.f32 %v27, 0.020833334
  %v177 = vmul.f32 %v28, 0.020833334
  %v178 = vmul.f32 %v29, 0.020833334
  %v179 = vmul.f32 %v30, 0.020833334
  %v180 = vadd.f32 %v176, 0.001
  %v181 = vadd.f32 %v177, 0.001
  %v182 = vadd.f32 %v178, 0.001
  %v183 = vadd.f32 %v179, 0.001
  %v184 = vfloor.f32 %v180
  %v185 = vfloor.f32 %v181
  %v186 = vfloor.f32 %v182
  %v187 = vfloor.f32 %v183
  %v188 = vmul.f32 %v184, 0.2
  %v189 = vmul.f32 %v185, 0.2
  %v190 = vmul.f32 %v186, 0.2
  %v191 = vmul.f32 %v187, 0.2
  %v192 = vadd.f32 %v188, 0.001
  %v193 = vadd.f32 %v189, 0.001
  %v194 = vadd.f32 %v190, 0.001
  %v195 = vadd.f32 %v191, 0.001
  %v196 = vfloor.f32 %v192
  %v197 = vfloor.f32 %v193
  %v198 = vfloor.f32 %v194
  %v199 = vfloor.f32 %v195
  %v200 = vmul.f32 %v196, 5.0
  %v201 = vmul.f32 %v197, 5.0
  %v202 = vmul.f32 %v198, 5.0
  %v203 = vmul.f32 %v199, 5.0
  %v204 = vsub.f32 %v184, %v200
  %v205 = vsub.f32 %v185, %v201
  %v206 = vsub.f32 %v186, %v202
  %v207 = vsub.f32 %v187, %v203
  %v208 = vsub.f32 %v204, 2.0
  %v209 = vsub.f32 %v205, 2.0
  %v210 = vsub.f32 %v206, 2.0
  %v211 = vsub.f32 %v207, 2.0
  %v212 = vmul.f32 %v208, 0.5
  %v213 = vmul.f32 %v209, 0.5
  %v214 = vmul.f32 %v210, 0.5
  %v215 = vmul.f32 %v211, 0.5
  %217 = vset.pattern.permute.xlu0 0
  %218 = vperm.xlu0 %217, %v212
  %v219 = vpop.permute.xlu0 %218
  %222 = vset.pattern.permute.xlu0 0
  %223 = vperm.xlu0 %222, %v213
  %v224 = vpop.permute.xlu0 %223
  %227 = vset.pattern.permute.xlu0 0
  %228 = vperm.xlu0 %227, %v214
  %v229 = vpop.permute.xlu0 %228
  %232 = vset.pattern.permute.xlu0 0
  %233 = vperm.xlu0 %232, %v215
  %v234 = vpop.permute.xlu0 %233
  %v236 = vlaneseq
  %v237 = vshrl.u32 %v236, 7
  %v238 = vsub.s32 2, %v237
  %v239 = vrot.slane %v24, %v238
  %v240 = vmul.f32 %v219, %v239
  %v241 = vmul.f32 %v224, %v239
  %v242 = vmul.f32 %v229, %v239
  %v243 = vmul.f32 %v234, %v239
  %v244 = vadd.f32 %v172, %v240
  %v245 = vadd.f32 %v173, %v241
  %v246 = vadd.f32 %v174, %v242
  %v247 = vadd.f32 %v175, %v243
  %v248 = vld [vmem:[%s1] sm:$0x1]
  %v249 = vsub.f32 1.0, %v248
  %v250 = vmul.f32 %v249, -1e+09
  %s251 = scalar_lea.vmem %s1, 1
  %v252 = vld [vmem:[%s251] sm:$0x1]
  %v253 = vsub.f32 1.0, %v252
  %v254 = vmul.f32 %v253, -1e+09
  %v255 = vld [vmem:[%s2] sm:$0xf]
  %v256 = vld [vmem:[%s2 + $0x4] sm:$0xf]
  %v257 = vld [vmem:[%s2 + $0x8] sm:$0xf]
  %v258 = vld [vmem:[%s2 + $0xc] sm:$0xf]
  %v259 = vld [vmem:[%s3] sm:$0xf]
  %v260 = vld [vmem:[%s3 + $0x4] sm:$0xf]
  %v261 = vld [vmem:[%s3 + $0x8] sm:$0xf]
  %v262 = vld [vmem:[%s3 + $0xc] sm:$0xf]
  %v263 = vld [vmem:[%s4] sm:$0xf]
  %v264 = vld [vmem:[%s4 + $0x4] sm:$0xf]
  %v265 = vld [vmem:[%s4 + $0x8] sm:$0xf]
  %v266 = vld [vmem:[%s4 + $0xc] sm:$0xf]
  %v267 = vld [vmem:[%s4 + $0x10] sm:$0xf]
  %v268 = vld [vmem:[%s4 + $0x14] sm:$0xf]
  %v269 = vld [vmem:[%s4 + $0x18] sm:$0xf]
  %v270 = vld [vmem:[%s4 + $0x1c] sm:$0xf]
  %vm271 = vcmask 261120
  %v272 = vsel %vm271, %v244, 0.0
  %273 = vadd.xlane.f32.xlu0 %v272
  %v274 = vpop.xlane.xlu0 %273
  %v275 = vsel %vm271, %v245, 0.0
  %276 = vadd.xlane.f32.xlu0 %v275
  %v277 = vpop.xlane.xlu0 %276
  %v278 = vsel %vm271, %v246, 0.0
  %279 = vadd.xlane.f32.xlu0 %v278
  %v280 = vpop.xlane.xlu0 %279
  %v281 = vsel %vm271, %v247, 0.0
  %282 = vadd.xlane.f32.xlu0 %v281
  %v283 = vpop.xlane.xlu0 %282
  %v284 = vrcp.pop 32.0
  %v285 = vmul.f32 %v274, %v284
  %v286 = vmul.f32 %v277, %v284
  %v287 = vmul.f32 %v280, %v284
  %v288 = vmul.f32 %v283, %v284
  %v289 = vmul.f32 %v244, %v244
  %v290 = vmul.f32 %v245, %v245
  %v291 = vmul.f32 %v246, %v246
  %v292 = vmul.f32 %v247, %v247
  %v293 = vsel %vm271, %v289, 0.0
  %294 = vadd.xlane.f32.xlu0 %v293
  %v295 = vpop.xlane.xlu0 %294
  %v296 = vsel %vm271, %v290, 0.0
  %297 = vadd.xlane.f32.xlu0 %v296
  %v298 = vpop.xlane.xlu0 %297
  %v299 = vsel %vm271, %v291, 0.0
  %300 = vadd.xlane.f32.xlu0 %v299
  %v301 = vpop.xlane.xlu0 %300
  %v302 = vsel %vm271, %v292, 0.0
  %303 = vadd.xlane.f32.xlu0 %v302
  %v304 = vpop.xlane.xlu0 %303
  %v305 = vmul.f32 %v295, %v284
  %v306 = vmul.f32 %v298, %v284
  %v307 = vmul.f32 %v301, %v284
  %v308 = vmul.f32 %v304, %v284
  %v309 = vmul.f32 %v285, %v285
  %v310 = vmul.f32 %v286, %v286
  %v311 = vmul.f32 %v287, %v287
  %v312 = vmul.f32 %v288, %v288
  %v313 = vsub.f32 %v305, %v309
  %v314 = vsub.f32 %v306, %v310
  %v315 = vsub.f32 %v307, %v311
  %v316 = vsub.f32 %v308, %v312
  %v317 = vsub.f32 %v244, %v285
  %v318 = vsub.f32 %v245, %v286
  %v319 = vsub.f32 %v246, %v287
  %v320 = vsub.f32 %v247, %v288
  %v321 = vadd.f32 %v313, 1e-05
  %v322 = vadd.f32 %v314, 1e-05
  %v323 = vadd.f32 %v315, 1e-05
  %v324 = vadd.f32 %v316, 1e-05
  %v325 = vrsqrt.pop %v321
  %v326 = vrsqrt.pop %v322
  %v327 = vrsqrt.pop %v323
  %v328 = vrsqrt.pop %v324
  %v329 = vmul.f32 %v317, %v325
  %v330 = vmul.f32 %v318, %v326
  %v331 = vmul.f32 %v319, %v327
  %v332 = vmul.f32 %v320, %v328
  %v333 = vlaneseq
  %v334 = vshrl.u32 %v333, 7
  %v335 = vsub.s32 4, %v334
  %v336 = vrot.slane %v24, %v335
  %v337 = vmul.f32 %v329, %v336
  %v338 = vmul.f32 %v330, %v336
  %v339 = vmul.f32 %v331, %v336
  %v340 = vmul.f32 %v332, %v336
  %v341 = vlaneseq
  %v342 = vshrl.u32 %v341, 7
  %v343 = vsub.s32 5, %v342
  %v344 = vrot.slane %v24, %v343
  %v345 = vadd.f32 %v337, %v344
  %v346 = vadd.f32 %v338, %v344
  %v347 = vadd.f32 %v339, %v344
  %v348 = vadd.f32 %v340, %v344
  %v349 = vpack.c.bf16 %v346, %v345
  %v350 = vpack.c.bf16 %v348, %v347
  %v355 = vunpack.c.l.b16 %v255
  %v356 = vunpack.c.l.b16 %v256
  %v357 = vunpack.c.l.b16 %v257
  %v358 = vunpack.c.l.b16 %v258
  %v359 = vpack.c.b16 %v356, %v355
  %v360 = vpack.c.b16 %v358, %v357
  %v364 = vsel %vm271, %v349, 0
  %v367 = vsel %vm271, %v350, 0
  %369 = vmatprep.subr.bf16.mxu0 0
  %370 = vmatpush1.bf16.msra.mxu0 0
  %371 = vmatprep.subr.bf16.mxu0 0
  %372 = vmatpush1.bf16.msra.mxu0 0
  %373 = vmatprep.subr.bf16.mxu0 0
  %374 = vmatpush1.bf16.msra.mxu0 0
  %375 = vmatprep.subr.bf16.mxu0 0
  %376 = vmatpush1.bf16.msra.mxu0 0
  %377 = vmatprep.subr.bf16.mxu0 0
  %378 = vmatpush1.bf16.msra.mxu0 0
  %379 = vmatprep.subr.bf16.mxu0 0
  %380 = vmatpush1.bf16.msra.mxu0 0
  %381 = vmatprep.subr.bf16.mxu0 0
  %382 = vmatpush1.bf16.msra.mxu0 %v360
  %383 = vmatprep.subr.bf16.mxu0 0
  %384 = vmatpush1.bf16.msra.mxu0 %v359
  %385 = vmatprep.subr.bf16.mxu0 0
  %386 = vmatpush2.bf16.msra.mxu0 0
  %387 = vmatprep.subr.bf16.mxu0 0
  %388 = vmatpush2.bf16.msra.mxu0 0
  %389 = vmatprep.subr.bf16.mxu0 0
  %390 = vmatpush2.bf16.msra.mxu0 0
  %391 = vmatprep.subr.bf16.mxu0 0
  %392 = vmatpush2.bf16.msra.mxu0 0
  %393 = vmatprep.subr.bf16.mxu0 0
  %394 = vmatpush2.bf16.msra.mxu0 0
  %395 = vmatprep.subr.bf16.mxu0 0
  %396 = vmatpush2.bf16.msra.mxu0 0
  %397 = vmatprep.subr.bf16.mxu0 0
  %398 = vmatpush2.bf16.msra.mxu0 0
  %399 = vmatprep.subr.bf16.mxu0 0
  %400 = vmatpush2.bf16.msra.mxu0 0
  %401 = vmatprep.mubr.bf16.mxu0 0
  %402 = vmatmul.mubr.bf16.gmra.mxu0 %v364
  %v403 = vpop.f32.mrf.mxu0
  %v404 = vadd.f32 0.0, %v403
  %v405 = vpop.f32.mrf.mxu0
  %v406 = vpop.f32.mrf.mxu0
  %v407 = vadd.f32 0.0, %v406
  %v408 = vpop.f32.mrf.mxu0
  %409 = vmatprep.mubr.bf16.mxu0 0
  %410 = vmatmul.mubr.bf16.gmra.mxu0 %v367
  %v411 = vpop.f32.mrf.mxu0
  %v412 = vadd.f32 0.0, %v411
  %v413 = vpop.f32.mrf.mxu0
  %v414 = vpop.f32.mrf.mxu0
  %v415 = vadd.f32 0.0, %v414
  %v416 = vpop.f32.mrf.mxu0
  %417 = vdwg.mxu0
  %v418 = vpack.c.bf16 %v407, %v404
  %v419 = vpack.c.bf16 %v415, %v412
  %v421 = vlaneseq
  %v422 = vshrl.u32 %v421, 7
  %v423 = vsub.s32 0, %v422
  %v424 = vrot.slane %v250, %v423
  %427 = vrot.lane.b32.xlu0 %v418, 96
  %v428 = vpop.permute.xlu0 %427
  %v430 = vsel %vm271, %v418, 0
  %v433 = vsel %vm271, %v428, 0
  %435 = vmatprep.subr.bf16.mxu0 0
  %436 = vmatpush1.bf16.xpose.msra.mxu0 0
  %437 = vmatprep.subr.bf16.mxu0 0
  %438 = vmatpush1.bf16.xpose.msra.mxu0 0
  %439 = vmatprep.subr.bf16.mxu0 0
  %440 = vmatpush1.bf16.xpose.msra.mxu0 0
  %441 = vmatprep.subr.bf16.mxu0 0
  %442 = vmatpush1.bf16.xpose.msra.mxu0 0
  %443 = vmatprep.subr.bf16.mxu0 0
  %444 = vmatpush1.bf16.xpose.msra.mxu0 0
  %445 = vmatprep.subr.bf16.mxu0 0
  %446 = vmatpush1.bf16.xpose.msra.mxu0 0
  %447 = vmatprep.subr.bf16.mxu0 0
  %448 = vmatpush1.bf16.xpose.msra.mxu0 0
  %449 = vmatprep.subr.bf16.mxu0 0
  %450 = vmatpush1.bf16.xpose.msra.mxu0 %v433
  %451 = vmatprep.subr.bf16.mxu0 0
  %452 = vmatpush2.bf16.xpose.msra.mxu0 0
  %453 = vmatprep.subr.bf16.mxu0 0
  %454 = vmatpush2.bf16.xpose.msra.mxu0 0
  %455 = vmatprep.subr.bf16.mxu0 0
  %456 = vmatpush2.bf16.xpose.msra.mxu0 0
  %457 = vmatprep.subr.bf16.mxu0 0
  %458 = vmatpush2.bf16.xpose.msra.mxu0 0
  %459 = vmatprep.subr.bf16.mxu0 0
  %460 = vmatpush2.bf16.xpose.msra.mxu0 0
  %461 = vmatprep.subr.bf16.mxu0 0
  %462 = vmatpush2.bf16.xpose.msra.mxu0 0
  %463 = vmatprep.subr.bf16.mxu0 0
  %464 = vmatpush2.bf16.xpose.msra.mxu0 0
  %465 = vmatprep.subr.bf16.mxu0 0
  %466 = vmatpush2.bf16.xpose.msra.mxu0 0
  %467 = vmatprep.mubr.bf16.mxu0 0
  %468 = vmatmul.mubr.bf16.gmra.mxu0 %v430
  %v469 = vpop.f32.mrf.mxu0
  %v470 = vadd.f32 %v424, %v469
  %v471 = vpop.f32.mrf.mxu0
  %v472 = vpop.f32.mrf.mxu0
  %v473 = vadd.f32 %v424, %v472
  %v474 = vpop.f32.mrf.mxu0
  %475 = vdwg.mxu0
  %vm476 = vcmask 130048
  %v477 = vsel %vm476, %v470, -inf
  %478 = vmax.xlane.f32.xlu0 %v477
  %v479 = vpop.xlane.xlu0 %478
  %v480 = vsel %vm476, %v473, -inf
  %481 = vmax.xlane.f32.xlu0 %v480
  %v482 = vpop.xlane.xlu0 %481
  %v483 = vsub.f32 %v470, %v479
  %v484 = vsub.f32 %v473, %v482
  %v485 = vmul.f32 %v483, 1.442695
  %v486 = vpow.pop %v485
  %v487 = vmul.f32 %v484, 1.442695
  %v488 = vpow.pop %v487
  %v489 = vsel %vm476, %v486, 0.0
  %490 = vadd.xlane.f32.xlu0 %v489
  %v491 = vpop.xlane.xlu0 %490
  %v492 = vsel %vm476, %v488, 0.0
  %493 = vadd.xlane.f32.xlu0 %v492
  %v494 = vpop.xlane.xlu0 %493
  %v495 = vrcp.pop %v491
  %v496 = vrcp.pop %v494
  %v497 = vmul.f32 %v486, %v495
  %v498 = vmul.f32 %v488, %v496
  %v499 = vpack.c.bf16 %v498, %v497
  %500 = vrot.lane.b32.xlu0 %v418, 64
  %v501 = vpop.permute.xlu0 %500
  %v504 = vsel %vm476, %v499, 0
  %506 = vmatprep.subr.bf16.mxu0 0
  %507 = vmatpush1.bf16.msra.mxu0 0
  %508 = vmatprep.subr.bf16.mxu0 0
  %509 = vmatpush1.bf16.msra.mxu0 0
  %510 = vmatprep.subr.bf16.mxu0 0
  %511 = vmatpush1.bf16.msra.mxu0 0
  %512 = vmatprep.subr.bf16.mxu0 0
  %513 = vmatpush1.bf16.msra.mxu0 0
  %514 = vmatprep.subr.bf16.mxu0 0
  %515 = vmatpush1.bf16.msra.mxu0 0
  %516 = vmatprep.subr.bf16.mxu0 0
  %517 = vmatpush1.bf16.msra.mxu0 0
  %518 = vmatprep.subr.bf16.mxu0 0
  %519 = vmatpush1.bf16.msra.mxu0 0
  %520 = vmatprep.subr.bf16.mxu0 0
  %521 = vmatpush1.bf16.msra.mxu0 %v501
  %522 = vmatprep.subr.bf16.mxu0 0
  %523 = vmatpush2.bf16.msra.mxu0 0
  %524 = vmatprep.subr.bf16.mxu0 0
  %525 = vmatpush2.bf16.msra.mxu0 0
  %526 = vmatprep.subr.bf16.mxu0 0
  %527 = vmatpush2.bf16.msra.mxu0 0
  %528 = vmatprep.subr.bf16.mxu0 0
  %529 = vmatpush2.bf16.msra.mxu0 0
  %530 = vmatprep.subr.bf16.mxu0 0
  %531 = vmatpush2.bf16.msra.mxu0 0
  %532 = vmatprep.subr.bf16.mxu0 0
  %533 = vmatpush2.bf16.msra.mxu0 0
  %534 = vmatprep.subr.bf16.mxu0 0
  %535 = vmatpush2.bf16.msra.mxu0 0
  %536 = vmatprep.subr.bf16.mxu0 0
  %537 = vmatpush2.bf16.msra.mxu0 0
  %538 = vmatprep.mubr.bf16.mxu0 0
  %539 = vmatmul.mubr.bf16.gmra.mxu0 %v504
  %v540 = vpop.f32.mrf.mxu0
  %v541 = vadd.f32 0.0, %v540
  %v542 = vpop.f32.mrf.mxu0
  %v543 = vpop.f32.mrf.mxu0
  %v544 = vadd.f32 0.0, %v543
  %v545 = vpop.f32.mrf.mxu0
  %546 = vdwg.mxu0
  %v548 = vlaneseq
  %v549 = vshrl.u32 %v548, 7
  %v550 = vsub.s32 0, %v549
  %v551 = vrot.slane %v254, %v550
  %554 = vrot.lane.b32.xlu0 %v419, 96
  %v555 = vpop.permute.xlu0 %554
  %v557 = vsel %vm271, %v419, 0
  %v560 = vsel %vm271, %v555, 0
  %562 = vmatprep.subr.bf16.mxu0 0
  %563 = vmatpush1.bf16.xpose.msra.mxu0 0
  %564 = vmatprep.subr.bf16.mxu0 0
  %565 = vmatpush1.bf16.xpose.msra.mxu0 0
  %566 = vmatprep.subr.bf16.mxu0 0
  %567 = vmatpush1.bf16.xpose.msra.mxu0 0
  %568 = vmatprep.subr.bf16.mxu0 0
  %569 = vmatpush1.bf16.xpose.msra.mxu0 0
  %570 = vmatprep.subr.bf16.mxu0 0
  %571 = vmatpush1.bf16.xpose.msra.mxu0 0
  %572 = vmatprep.subr.bf16.mxu0 0
  %573 = vmatpush1.bf16.xpose.msra.mxu0 0
  %574 = vmatprep.subr.bf16.mxu0 0
  %575 = vmatpush1.bf16.xpose.msra.mxu0 0
  %576 = vmatprep.subr.bf16.mxu0 0
  %577 = vmatpush1.bf16.xpose.msra.mxu0 %v560
  %578 = vmatprep.subr.bf16.mxu0 0
  %579 = vmatpush2.bf16.xpose.msra.mxu0 0
  %580 = vmatprep.subr.bf16.mxu0 0
  %581 = vmatpush2.bf16.xpose.msra.mxu0 0
  %582 = vmatprep.subr.bf16.mxu0 0
  %583 = vmatpush2.bf16.xpose.msra.mxu0 0
  %584 = vmatprep.subr.bf16.mxu0 0
  %585 = vmatpush2.bf16.xpose.msra.mxu0 0
  %586 = vmatprep.subr.bf16.mxu0 0
  %587 = vmatpush2.bf16.xpose.msra.mxu0 0
  %588 = vmatprep.subr.bf16.mxu0 0
  %589 = vmatpush2.bf16.xpose.msra.mxu0 0
  %590 = vmatprep.subr.bf16.mxu0 0
  %591 = vmatpush2.bf16.xpose.msra.mxu0 0
  %592 = vmatprep.subr.bf16.mxu0 0
  %593 = vmatpush2.bf16.xpose.msra.mxu0 0
  %594 = vmatprep.mubr.bf16.mxu0 0
  %595 = vmatmul.mubr.bf16.gmra.mxu0 %v557
  %v596 = vpop.f32.mrf.mxu0
  %v597 = vadd.f32 %v551, %v596
  %v598 = vpop.f32.mrf.mxu0
  %v599 = vpop.f32.mrf.mxu0
  %v600 = vadd.f32 %v551, %v599
  %v601 = vpop.f32.mrf.mxu0
  %602 = vdwg.mxu0
  %v603 = vsel %vm476, %v597, -inf
  %604 = vmax.xlane.f32.xlu0 %v603
  %v605 = vpop.xlane.xlu0 %604
  %v606 = vsel %vm476, %v600, -inf
  %607 = vmax.xlane.f32.xlu0 %v606
  %v608 = vpop.xlane.xlu0 %607
  %v609 = vsub.f32 %v597, %v605
  %v610 = vsub.f32 %v600, %v608
  %v611 = vmul.f32 %v609, 1.442695
  %v612 = vpow.pop %v611
  %v613 = vmul.f32 %v610, 1.442695
  %v614 = vpow.pop %v613
  %v615 = vsel %vm476, %v612, 0.0
  %616 = vadd.xlane.f32.xlu0 %v615
  %v617 = vpop.xlane.xlu0 %616
  %v618 = vsel %vm476, %v614, 0.0
  %619 = vadd.xlane.f32.xlu0 %v618
  %v620 = vpop.xlane.xlu0 %619
  %v621 = vrcp.pop %v617
  %v622 = vrcp.pop %v620
  %v623 = vmul.f32 %v612, %v621
  %v624 = vmul.f32 %v614, %v622
  %v625 = vpack.c.bf16 %v624, %v623
  %626 = vrot.lane.b32.xlu0 %v419, 64
  %v627 = vpop.permute.xlu0 %626
  %v630 = vsel %vm476, %v625, 0
  %632 = vmatprep.subr.bf16.mxu0 0
  %633 = vmatpush1.bf16.msra.mxu0 0
  %634 = vmatprep.subr.bf16.mxu0 0
  %635 = vmatpush1.bf16.msra.mxu0 0
  %636 = vmatprep.subr.bf16.mxu0 0
  %637 = vmatpush1.bf16.msra.mxu0 0
  %638 = vmatprep.subr.bf16.mxu0 0
  %639 = vmatpush1.bf16.msra.mxu0 0
  %640 = vmatprep.subr.bf16.mxu0 0
  %641 = vmatpush1.bf16.msra.mxu0 0
  %642 = vmatprep.subr.bf16.mxu0 0
  %643 = vmatpush1.bf16.msra.mxu0 0
  %644 = vmatprep.subr.bf16.mxu0 0
  %645 = vmatpush1.bf16.msra.mxu0 0
  %646 = vmatprep.subr.bf16.mxu0 0
  %647 = vmatpush1.bf16.msra.mxu0 %v627
  %648 = vmatprep.subr.bf16.mxu0 0
  %649 = vmatpush2.bf16.msra.mxu0 0
  %650 = vmatprep.subr.bf16.mxu0 0
  %651 = vmatpush2.bf16.msra.mxu0 0
  %652 = vmatprep.subr.bf16.mxu0 0
  %653 = vmatpush2.bf16.msra.mxu0 0
  %654 = vmatprep.subr.bf16.mxu0 0
  %655 = vmatpush2.bf16.msra.mxu0 0
  %656 = vmatprep.subr.bf16.mxu0 0
  %657 = vmatpush2.bf16.msra.mxu0 0
  %658 = vmatprep.subr.bf16.mxu0 0
  %659 = vmatpush2.bf16.msra.mxu0 0
  %660 = vmatprep.subr.bf16.mxu0 0
  %661 = vmatpush2.bf16.msra.mxu0 0
  %662 = vmatprep.subr.bf16.mxu0 0
  %663 = vmatpush2.bf16.msra.mxu0 0
  %664 = vmatprep.mubr.bf16.mxu0 0
  %665 = vmatmul.mubr.bf16.gmra.mxu0 %v630
  %v666 = vpop.f32.mrf.mxu0
  %v667 = vadd.f32 0.0, %v666
  %v668 = vpop.f32.mrf.mxu0
  %v669 = vpop.f32.mrf.mxu0
  %v670 = vadd.f32 0.0, %v669
  %v671 = vpop.f32.mrf.mxu0
  %672 = vdwg.mxu0
  %v673 = vpack.c.bf16 %v544, %v541
  %v674 = vpack.c.bf16 %v670, %v667
  %675 = vrot.lane.b32.xlu0 %v359, 32
  %v676 = vpop.permute.xlu0 %675
  %677 = vrot.lane.b32.xlu0 %v360, 32
  %v678 = vpop.permute.xlu0 %677
  %v682 = vsel %vm271, %v673, 0
  %v685 = vsel %vm271, %v674, 0
  %687 = vmatprep.subr.bf16.mxu0 0
  %688 = vmatpush1.bf16.msra.mxu0 0
  %689 = vmatprep.subr.bf16.mxu0 0
  %690 = vmatpush1.bf16.msra.mxu0 0
  %691 = vmatprep.subr.bf16.mxu0 0
  %692 = vmatpush1.bf16.msra.mxu0 0
  %693 = vmatprep.subr.bf16.mxu0 0
  %694 = vmatpush1.bf16.msra.mxu0 0
  %695 = vmatprep.subr.bf16.mxu0 0
  %696 = vmatpush1.bf16.msra.mxu0 0
  %697 = vmatprep.subr.bf16.mxu0 0
  %698 = vmatpush1.bf16.msra.mxu0 0
  %699 = vmatprep.subr.bf16.mxu0 0
  %700 = vmatpush1.bf16.msra.mxu0 %v678
  %701 = vmatprep.subr.bf16.mxu0 0
  %702 = vmatpush1.bf16.msra.mxu0 %v676
  %703 = vmatprep.subr.bf16.mxu0 0
  %704 = vmatpush2.bf16.msra.mxu0 0
  %705 = vmatprep.subr.bf16.mxu0 0
  %706 = vmatpush2.bf16.msra.mxu0 0
  %707 = vmatprep.subr.bf16.mxu0 0
  %708 = vmatpush2.bf16.msra.mxu0 0
  %709 = vmatprep.subr.bf16.mxu0 0
  %710 = vmatpush2.bf16.msra.mxu0 0
  %711 = vmatprep.subr.bf16.mxu0 0
  %712 = vmatpush2.bf16.msra.mxu0 0
  %713 = vmatprep.subr.bf16.mxu0 0
  %714 = vmatpush2.bf16.msra.mxu0 0
  %715 = vmatprep.subr.bf16.mxu0 0
  %716 = vmatpush2.bf16.msra.mxu0 0
  %717 = vmatprep.subr.bf16.mxu0 0
  %718 = vmatpush2.bf16.msra.mxu0 0
  %719 = vmatprep.mubr.bf16.mxu0 0
  %720 = vmatmul.mubr.bf16.gmra.mxu0 %v682
  %v721 = vpop.f32.mrf.mxu0
  %v722 = vadd.f32 0.0, %v721
  %v723 = vpop.f32.mrf.mxu0
  %v724 = vpop.f32.mrf.mxu0
  %v725 = vadd.f32 0.0, %v724
  %v726 = vpop.f32.mrf.mxu0
  %727 = vmatprep.mubr.bf16.mxu0 0
  %728 = vmatmul.mubr.bf16.gmra.mxu0 %v685
  %v729 = vpop.f32.mrf.mxu0
  %v730 = vadd.f32 0.0, %v729
  %v731 = vpop.f32.mrf.mxu0
  %v732 = vpop.f32.mrf.mxu0
  %v733 = vadd.f32 0.0, %v732
  %v734 = vpop.f32.mrf.mxu0
  %735 = vdwg.mxu0
  %v736 = vadd.f32 %v244, %v722
  %v737 = vadd.f32 %v245, %v725
  %v738 = vadd.f32 %v246, %v730
  %v739 = vadd.f32 %v247, %v733
  %v740 = vsel %vm271, %v736, 0.0
  %741 = vadd.xlane.f32.xlu0 %v740
  %v742 = vpop.xlane.xlu0 %741
  %v743 = vsel %vm271, %v737, 0.0
  %744 = vadd.xlane.f32.xlu0 %v743
  %v745 = vpop.xlane.xlu0 %744
  %v746 = vsel %vm271, %v738, 0.0
  %747 = vadd.xlane.f32.xlu0 %v746
  %v748 = vpop.xlane.xlu0 %747
  %v749 = vsel %vm271, %v739, 0.0
  %750 = vadd.xlane.f32.xlu0 %v749
  %v751 = vpop.xlane.xlu0 %750
  %v752 = vmul.f32 %v742, %v284
  %v753 = vmul.f32 %v745, %v284
  %v754 = vmul.f32 %v748, %v284
  %v755 = vmul.f32 %v751, %v284
  %v756 = vmul.f32 %v736, %v736
  %v757 = vmul.f32 %v737, %v737
  %v758 = vmul.f32 %v738, %v738
  %v759 = vmul.f32 %v739, %v739
  %v760 = vsel %vm271, %v756, 0.0
  %761 = vadd.xlane.f32.xlu0 %v760
  %v762 = vpop.xlane.xlu0 %761
  %v763 = vsel %vm271, %v757, 0.0
  %764 = vadd.xlane.f32.xlu0 %v763
  %v765 = vpop.xlane.xlu0 %764
  %v766 = vsel %vm271, %v758, 0.0
  %767 = vadd.xlane.f32.xlu0 %v766
  %v768 = vpop.xlane.xlu0 %767
  %v769 = vsel %vm271, %v759, 0.0
  %770 = vadd.xlane.f32.xlu0 %v769
  %v771 = vpop.xlane.xlu0 %770
  %v772 = vmul.f32 %v762, %v284
  %v773 = vmul.f32 %v765, %v284
  %v774 = vmul.f32 %v768, %v284
  %v775 = vmul.f32 %v771, %v284
  %v776 = vmul.f32 %v752, %v752
  %v777 = vmul.f32 %v753, %v753
  %v778 = vmul.f32 %v754, %v754
  %v779 = vmul.f32 %v755, %v755
  %v780 = vsub.f32 %v772, %v776
  %v781 = vsub.f32 %v773, %v777
  %v782 = vsub.f32 %v774, %v778
  %v783 = vsub.f32 %v775, %v779
  %v784 = vsub.f32 %v736, %v752
  %v785 = vsub.f32 %v737, %v753
  %v786 = vsub.f32 %v738, %v754
  %v787 = vsub.f32 %v739, %v755
  %v788 = vadd.f32 %v780, 1e-05
  %v789 = vadd.f32 %v781, 1e-05
  %v790 = vadd.f32 %v782, 1e-05
  %v791 = vadd.f32 %v783, 1e-05
  %v792 = vrsqrt.pop %v788
  %v793 = vrsqrt.pop %v789
  %v794 = vrsqrt.pop %v790
  %v795 = vrsqrt.pop %v791
  %v796 = vmul.f32 %v784, %v792
  %v797 = vmul.f32 %v785, %v793
  %v798 = vmul.f32 %v786, %v794
  %v799 = vmul.f32 %v787, %v795
  %v800 = vlaneseq
  %v801 = vshrl.u32 %v800, 7
  %v802 = vsub.s32 6, %v801
  %v803 = vrot.slane %v24, %v802
  %v804 = vmul.f32 %v796, %v803
  %v805 = vmul.f32 %v797, %v803
  %v806 = vmul.f32 %v798, %v803
  %v807 = vmul.f32 %v799, %v803
  %v808 = vlaneseq
  %v809 = vshrl.u32 %v808, 7
  %v810 = vsub.s32 7, %v809
  %v811 = vrot.slane %v24, %v810
  %v812 = vadd.f32 %v804, %v811
  %v813 = vadd.f32 %v805, %v811
  %v814 = vadd.f32 %v806, %v811
  %v815 = vadd.f32 %v807, %v811
  %v816 = vpack.c.bf16 %v813, %v812
  %v817 = vpack.c.bf16 %v815, %v814
  %v818 = vlaneseq
  %v819 = vshrl.u32 %v818, 7
  %v820 = vsub.s32 0, %v819
  %v821 = vrot.slane %v25, %v820
  %v826 = vunpack.c.l.b16 %v259
  %v827 = vunpack.c.l.b16 %v260
  %v828 = vunpack.c.l.b16 %v261
  %v829 = vunpack.c.l.b16 %v262
  %v830 = vpack.c.b16 %v827, %v826
  %v831 = vpack.c.b16 %v829, %v828
  %v835 = vsel %vm271, %v816, 0
  %v838 = vsel %vm271, %v817, 0
  %840 = vmatprep.subr.bf16.mxu0 0
  %841 = vmatpush1.bf16.msra.mxu0 0
  %842 = vmatprep.subr.bf16.mxu0 0
  %843 = vmatpush1.bf16.msra.mxu0 0
  %844 = vmatprep.subr.bf16.mxu0 0
  %845 = vmatpush1.bf16.msra.mxu0 0
  %846 = vmatprep.subr.bf16.mxu0 0
  %847 = vmatpush1.bf16.msra.mxu0 0
  %848 = vmatprep.subr.bf16.mxu0 0
  %849 = vmatpush1.bf16.msra.mxu0 0
  %850 = vmatprep.subr.bf16.mxu0 0
  %851 = vmatpush1.bf16.msra.mxu0 0
  %852 = vmatprep.subr.bf16.mxu0 0
  %853 = vmatpush1.bf16.msra.mxu0 %v831
  %854 = vmatprep.subr.bf16.mxu0 0
  %855 = vmatpush1.bf16.msra.mxu0 %v830
  %856 = vmatprep.subr.bf16.mxu0 0
  %857 = vmatpush2.bf16.msra.mxu0 0
  %858 = vmatprep.subr.bf16.mxu0 0
  %859 = vmatpush2.bf16.msra.mxu0 0
  %860 = vmatprep.subr.bf16.mxu0 0
  %861 = vmatpush2.bf16.msra.mxu0 0
  %862 = vmatprep.subr.bf16.mxu0 0
  %863 = vmatpush2.bf16.msra.mxu0 0
  %864 = vmatprep.subr.bf16.mxu0 0
  %865 = vmatpush2.bf16.msra.mxu0 0
  %866 = vmatprep.subr.bf16.mxu0 0
  %867 = vmatpush2.bf16.msra.mxu0 0
  %868 = vmatprep.subr.bf16.mxu0 0
  %869 = vmatpush2.bf16.msra.mxu0 0
  %870 = vmatprep.subr.bf16.mxu0 0
  %871 = vmatpush2.bf16.msra.mxu0 0
  %872 = vmatprep.mubr.bf16.mxu0 0
  %873 = vmatmul.mubr.bf16.gmra.mxu0 %v835
  %v874 = vpop.f32.mrf.mxu0
  %v875 = vadd.f32 %v821, %v874
  %v876 = vpop.f32.mrf.mxu0
  %v877 = vpop.f32.mrf.mxu0
  %v878 = vadd.f32 %v821, %v877
  %v879 = vpop.f32.mrf.mxu0
  %880 = vmatprep.mubr.bf16.mxu0 0
  %881 = vmatmul.mubr.bf16.gmra.mxu0 %v838
  %v882 = vpop.f32.mrf.mxu0
  %v883 = vadd.f32 %v821, %v882
  %v884 = vpop.f32.mrf.mxu0
  %v885 = vpop.f32.mrf.mxu0
  %v886 = vadd.f32 %v821, %v885
  %v887 = vpop.f32.mrf.mxu0
  %888 = vdwg.mxu0
  %v889 = vmul.f32 %v875, %v875
  %v890 = vmul.f32 %v878, %v878
  %v891 = vmul.f32 %v883, %v883
  %v892 = vmul.f32 %v886, %v886
  %v893 = vmul.f32 %v875, %v889
  %v894 = vmul.f32 %v878, %v890
  %v895 = vmul.f32 %v883, %v891
  %v896 = vmul.f32 %v886, %v892
  %v897 = vmul.f32 %v893, 0.044715
  %v898 = vmul.f32 %v894, 0.044715
  %v899 = vmul.f32 %v895, 0.044715
  %v900 = vmul.f32 %v896, 0.044715
  %v901 = vadd.f32 %v875, %v897
  %v902 = vadd.f32 %v878, %v898
  %v903 = vadd.f32 %v883, %v899
  %v904 = vadd.f32 %v886, %v900
  %v905 = vmul.f32 %v901, 0.7978846
  %v906 = vmul.f32 %v902, 0.7978846
  %v907 = vmul.f32 %v903, 0.7978846
  %v908 = vmul.f32 %v904, 0.7978846
  %v909 = vtanh.pop %v905
  %v910 = vtanh.pop %v906
  %v911 = vtanh.pop %v907
  %v912 = vtanh.pop %v908
  %v913 = vadd.f32 %v909, 1.0
  %v914 = vadd.f32 %v910, 1.0
  %v915 = vadd.f32 %v911, 1.0
  %v916 = vadd.f32 %v912, 1.0
  %v917 = vmul.f32 %v913, 0.5
  %v918 = vmul.f32 %v914, 0.5
  %v919 = vmul.f32 %v915, 0.5
  %v920 = vmul.f32 %v916, 0.5
  %v921 = vmul.f32 %v875, %v917
  %v922 = vmul.f32 %v878, %v918
  %v923 = vmul.f32 %v883, %v919
  %v924 = vmul.f32 %v886, %v920
  %v925 = vpack.c.bf16 %v922, %v921
  %v926 = vpack.c.bf16 %v924, %v923
  %v935 = vunpack.c.l.b16 %v263
  %v936 = vunpack.c.l.b16 %v264
  %v937 = vunpack.c.l.b16 %v265
  %v938 = vunpack.c.l.b16 %v266
  %v939 = vunpack.c.l.b16 %v267
  %v940 = vunpack.c.l.b16 %v268
  %v941 = vunpack.c.l.b16 %v269
  %v942 = vunpack.c.l.b16 %v270
  %v943 = vpack.c.b16 %v936, %v935
  %v944 = vpack.c.b16 %v938, %v937
  %v945 = vpack.c.b16 %v940, %v939
  %v946 = vpack.c.b16 %v942, %v941
  %vm951 = vcmask 523264
  %v953 = vsel %vm951, %v925, 0
  %v956 = vsel %vm951, %v926, 0
  %958 = vmatprep.subr.bf16.mxu0 0
  %959 = vmatpush1.bf16.msra.mxu0 0
  %960 = vmatprep.subr.bf16.mxu0 0
  %961 = vmatpush1.bf16.msra.mxu0 0
  %962 = vmatprep.subr.bf16.mxu0 0
  %963 = vmatpush1.bf16.msra.mxu0 0
  %964 = vmatprep.subr.bf16.mxu0 0
  %965 = vmatpush1.bf16.msra.mxu0 0
  %966 = vmatprep.subr.bf16.mxu0 0
  %967 = vmatpush1.bf16.msra.mxu0 %v946
  %968 = vmatprep.subr.bf16.mxu0 0
  %969 = vmatpush1.bf16.msra.mxu0 %v945
  %970 = vmatprep.subr.bf16.mxu0 0
  %971 = vmatpush1.bf16.msra.mxu0 %v944
  %972 = vmatprep.subr.bf16.mxu0 0
  %973 = vmatpush1.bf16.msra.mxu0 %v943
  %974 = vmatprep.subr.bf16.mxu0 0
  %975 = vmatpush2.bf16.msra.mxu0 0
  %976 = vmatprep.subr.bf16.mxu0 0
  %977 = vmatpush2.bf16.msra.mxu0 0
  %978 = vmatprep.subr.bf16.mxu0 0
  %979 = vmatpush2.bf16.msra.mxu0 0
  %980 = vmatprep.subr.bf16.mxu0 0
  %981 = vmatpush2.bf16.msra.mxu0 0
  %982 = vmatprep.subr.bf16.mxu0 0
  %983 = vmatpush2.bf16.msra.mxu0 0
  %984 = vmatprep.subr.bf16.mxu0 0
  %985 = vmatpush2.bf16.msra.mxu0 0
  %986 = vmatprep.subr.bf16.mxu0 0
  %987 = vmatpush2.bf16.msra.mxu0 0
  %988 = vmatprep.subr.bf16.mxu0 0
  %989 = vmatpush2.bf16.msra.mxu0 0
  %990 = vmatprep.mubr.bf16.mxu0 0
  %991 = vmatmul.mubr.bf16.gmra.mxu0 %v953
  %v992 = vpop.f32.mrf.mxu0
  %v993 = vadd.f32 0.0, %v992
  %v994 = vpop.f32.mrf.mxu0
  %v995 = vpop.f32.mrf.mxu0
  %v996 = vadd.f32 0.0, %v995
  %v997 = vpop.f32.mrf.mxu0
  %998 = vmatprep.mubr.bf16.mxu0 0
  %999 = vmatmul.mubr.bf16.gmra.mxu0 %v956
  %v1000 = vpop.f32.mrf.mxu0
  %v1001 = vadd.f32 0.0, %v1000
  %v1002 = vpop.f32.mrf.mxu0
  %v1003 = vpop.f32.mrf.mxu0
  %v1004 = vadd.f32 0.0, %v1003
  %v1005 = vpop.f32.mrf.mxu0
  %1006 = vdwg.mxu0
  %v1007 = vadd.f32 %v736, %v993
  %v1008 = vadd.f32 %v737, %v996
  %v1009 = vadd.f32 %v738, %v1001
  %v1010 = vadd.f32 %v739, %v1004
  %v1011 = vlaneseq
  %v1012 = vshrl.u32 %v1011, 7
  %v1013 = vsub.s32 1, %v1012
  %v1014 = vrot.slane %v25, %v1013
  %v1015 = vadd.f32 %v1007, %v1014
  %v1016 = vadd.f32 %v1008, %v1014
  %v1017 = vadd.f32 %v1009, %v1014
  %v1018 = vadd.f32 %v1010, %v1014
  %s1019 = scalar_lea.vmem %s2, 16
  %v1020 = vld [vmem:[%s1019] sm:$0xf]
  %v1021 = vld [vmem:[%s1019 + $0x4] sm:$0xf]
  %v1022 = vld [vmem:[%s1019 + $0x8] sm:$0xf]
  %v1023 = vld [vmem:[%s1019 + $0xc] sm:$0xf]
  %s1024 = scalar_lea.vmem %s3, 16
  %v1025 = vld [vmem:[%s1024] sm:$0xf]
  %v1026 = vld [vmem:[%s1024 + $0x4] sm:$0xf]
  %v1027 = vld [vmem:[%s1024 + $0x8] sm:$0xf]
  %v1028 = vld [vmem:[%s1024 + $0xc] sm:$0xf]
  %s1029 = scalar_lea.vmem %s4, 32
  %v1030 = vld [vmem:[%s1029] sm:$0xf]
  %v1031 = vld [vmem:[%s1029 + $0x4] sm:$0xf]
  %v1032 = vld [vmem:[%s1029 + $0x8] sm:$0xf]
  %v1033 = vld [vmem:[%s1029 + $0xc] sm:$0xf]
  %v1034 = vld [vmem:[%s1029 + $0x10] sm:$0xf]
  %v1035 = vld [vmem:[%s1029 + $0x14] sm:$0xf]
  %v1036 = vld [vmem:[%s1029 + $0x18] sm:$0xf]
  %v1037 = vld [vmem:[%s1029 + $0x1c] sm:$0xf]
  %v1038 = vsel %vm271, %v1015, 0.0
  %1039 = vadd.xlane.f32.xlu0 %v1038
  %v1040 = vpop.xlane.xlu0 %1039
  %v1041 = vsel %vm271, %v1016, 0.0
  %1042 = vadd.xlane.f32.xlu0 %v1041
  %v1043 = vpop.xlane.xlu0 %1042
  %v1044 = vsel %vm271, %v1017, 0.0
  %1045 = vadd.xlane.f32.xlu0 %v1044
  %v1046 = vpop.xlane.xlu0 %1045
  %v1047 = vsel %vm271, %v1018, 0.0
  %1048 = vadd.xlane.f32.xlu0 %v1047
  %v1049 = vpop.xlane.xlu0 %1048
  %v1050 = vmul.f32 %v1040, %v284
  %v1051 = vmul.f32 %v1043, %v284
  %v1052 = vmul.f32 %v1046, %v284
  %v1053 = vmul.f32 %v1049, %v284
  %v1054 = vmul.f32 %v1015, %v1015
  %v1055 = vmul.f32 %v1016, %v1016
  %v1056 = vmul.f32 %v1017, %v1017
  %v1057 = vmul.f32 %v1018, %v1018
  %v1058 = vsel %vm271, %v1054, 0.0
  %1059 = vadd.xlane.f32.xlu0 %v1058
  %v1060 = vpop.xlane.xlu0 %1059
  %v1061 = vsel %vm271, %v1055, 0.0
  %1062 = vadd.xlane.f32.xlu0 %v1061
  %v1063 = vpop.xlane.xlu0 %1062
  %v1064 = vsel %vm271, %v1056, 0.0
  %1065 = vadd.xlane.f32.xlu0 %v1064
  %v1066 = vpop.xlane.xlu0 %1065
  %v1067 = vsel %vm271, %v1057, 0.0
  %1068 = vadd.xlane.f32.xlu0 %v1067
  %v1069 = vpop.xlane.xlu0 %1068
  %v1070 = vmul.f32 %v1060, %v284
  %v1071 = vmul.f32 %v1063, %v284
  %v1072 = vmul.f32 %v1066, %v284
  %v1073 = vmul.f32 %v1069, %v284
  %v1074 = vmul.f32 %v1050, %v1050
  %v1075 = vmul.f32 %v1051, %v1051
  %v1076 = vmul.f32 %v1052, %v1052
  %v1077 = vmul.f32 %v1053, %v1053
  %v1078 = vsub.f32 %v1070, %v1074
  %v1079 = vsub.f32 %v1071, %v1075
  %v1080 = vsub.f32 %v1072, %v1076
  %v1081 = vsub.f32 %v1073, %v1077
  %v1082 = vsub.f32 %v1015, %v1050
  %v1083 = vsub.f32 %v1016, %v1051
  %v1084 = vsub.f32 %v1017, %v1052
  %v1085 = vsub.f32 %v1018, %v1053
  %v1086 = vadd.f32 %v1078, 1e-05
  %v1087 = vadd.f32 %v1079, 1e-05
  %v1088 = vadd.f32 %v1080, 1e-05
  %v1089 = vadd.f32 %v1081, 1e-05
  %v1090 = vrsqrt.pop %v1086
  %v1091 = vrsqrt.pop %v1087
  %v1092 = vrsqrt.pop %v1088
  %v1093 = vrsqrt.pop %v1089
  %v1094 = vmul.f32 %v1082, %v1090
  %v1095 = vmul.f32 %v1083, %v1091
  %v1096 = vmul.f32 %v1084, %v1092
  %v1097 = vmul.f32 %v1085, %v1093
  %v1098 = vlaneseq
  %v1099 = vshrl.u32 %v1098, 7
  %v1100 = vsub.s32 2, %v1099
  %v1101 = vrot.slane %v25, %v1100
  %v1102 = vmul.f32 %v1094, %v1101
  %v1103 = vmul.f32 %v1095, %v1101
  %v1104 = vmul.f32 %v1096, %v1101
  %v1105 = vmul.f32 %v1097, %v1101
  %v1106 = vlaneseq
  %v1107 = vshrl.u32 %v1106, 7
  %v1108 = vsub.s32 3, %v1107
  %v1109 = vrot.slane %v25, %v1108
  %v1110 = vadd.f32 %v1102, %v1109
  %v1111 = vadd.f32 %v1103, %v1109
  %v1112 = vadd.f32 %v1104, %v1109
  %v1113 = vadd.f32 %v1105, %v1109
  %v1114 = vpack.c.bf16 %v1111, %v1110
  %v1115 = vpack.c.bf16 %v1113, %v1112
  %v1120 = vunpack.c.l.b16 %v1020
  %v1121 = vunpack.c.l.b16 %v1021
  %v1122 = vunpack.c.l.b16 %v1022
  %v1123 = vunpack.c.l.b16 %v1023
  %v1124 = vpack.c.b16 %v1121, %v1120
  %v1125 = vpack.c.b16 %v1123, %v1122
  %v1129 = vsel %vm271, %v1114, 0
  %v1132 = vsel %vm271, %v1115, 0
  %1134 = vmatprep.subr.bf16.mxu0 0
  %1135 = vmatpush1.bf16.msra.mxu0 0
  %1136 = vmatprep.subr.bf16.mxu0 0
  %1137 = vmatpush1.bf16.msra.mxu0 0
  %1138 = vmatprep.subr.bf16.mxu0 0
  %1139 = vmatpush1.bf16.msra.mxu0 0
  %1140 = vmatprep.subr.bf16.mxu0 0
  %1141 = vmatpush1.bf16.msra.mxu0 0
  %1142 = vmatprep.subr.bf16.mxu0 0
  %1143 = vmatpush1.bf16.msra.mxu0 0
  %1144 = vmatprep.subr.bf16.mxu0 0
  %1145 = vmatpush1.bf16.msra.mxu0 0
  %1146 = vmatprep.subr.bf16.mxu0 0
  %1147 = vmatpush1.bf16.msra.mxu0 %v1125
  %1148 = vmatprep.subr.bf16.mxu0 0
  %1149 = vmatpush1.bf16.msra.mxu0 %v1124
  %1150 = vmatprep.subr.bf16.mxu0 0
  %1151 = vmatpush2.bf16.msra.mxu0 0
  %1152 = vmatprep.subr.bf16.mxu0 0
  %1153 = vmatpush2.bf16.msra.mxu0 0
  %1154 = vmatprep.subr.bf16.mxu0 0
  %1155 = vmatpush2.bf16.msra.mxu0 0
  %1156 = vmatprep.subr.bf16.mxu0 0
  %1157 = vmatpush2.bf16.msra.mxu0 0
  %1158 = vmatprep.subr.bf16.mxu0 0
  %1159 = vmatpush2.bf16.msra.mxu0 0
  %1160 = vmatprep.subr.bf16.mxu0 0
  %1161 = vmatpush2.bf16.msra.mxu0 0
  %1162 = vmatprep.subr.bf16.mxu0 0
  %1163 = vmatpush2.bf16.msra.mxu0 0
  %1164 = vmatprep.subr.bf16.mxu0 0
  %1165 = vmatpush2.bf16.msra.mxu0 0
  %1166 = vmatprep.mubr.bf16.mxu0 0
  %1167 = vmatmul.mubr.bf16.gmra.mxu0 %v1129
  %v1168 = vpop.f32.mrf.mxu0
  %v1169 = vadd.f32 0.0, %v1168
  %v1170 = vpop.f32.mrf.mxu0
  %v1171 = vpop.f32.mrf.mxu0
  %v1172 = vadd.f32 0.0, %v1171
  %v1173 = vpop.f32.mrf.mxu0
  %1174 = vmatprep.mubr.bf16.mxu0 0
  %1175 = vmatmul.mubr.bf16.gmra.mxu0 %v1132
  %v1176 = vpop.f32.mrf.mxu0
  %v1177 = vadd.f32 0.0, %v1176
  %v1178 = vpop.f32.mrf.mxu0
  %v1179 = vpop.f32.mrf.mxu0
  %v1180 = vadd.f32 0.0, %v1179
  %v1181 = vpop.f32.mrf.mxu0
  %1182 = vdwg.mxu0
  %v1183 = vpack.c.bf16 %v1172, %v1169
  %v1184 = vpack.c.bf16 %v1180, %v1177
  %1186 = vrot.lane.b32.xlu0 %v1183, 96
  %v1187 = vpop.permute.xlu0 %1186
  %v1189 = vsel %vm271, %v1183, 0
  %v1192 = vsel %vm271, %v1187, 0
  %1194 = vmatprep.subr.bf16.mxu0 0
  %1195 = vmatpush1.bf16.xpose.msra.mxu0 0
  %1196 = vmatprep.subr.bf16.mxu0 0
  %1197 = vmatpush1.bf16.xpose.msra.mxu0 0
  %1198 = vmatprep.subr.bf16.mxu0 0
  %1199 = vmatpush1.bf16.xpose.msra.mxu0 0
  %1200 = vmatprep.subr.bf16.mxu0 0
  %1201 = vmatpush1.bf16.xpose.msra.mxu0 0
  %1202 = vmatprep.subr.bf16.mxu0 0
  %1203 = vmatpush1.bf16.xpose.msra.mxu0 0
  %1204 = vmatprep.subr.bf16.mxu0 0
  %1205 = vmatpush1.bf16.xpose.msra.mxu0 0
  %1206 = vmatprep.subr.bf16.mxu0 0
  %1207 = vmatpush1.bf16.xpose.msra.mxu0 0
  %1208 = vmatprep.subr.bf16.mxu0 0
  %1209 = vmatpush1.bf16.xpose.msra.mxu0 %v1192
  %1210 = vmatprep.subr.bf16.mxu0 0
  %1211 = vmatpush2.bf16.xpose.msra.mxu0 0
  %1212 = vmatprep.subr.bf16.mxu0 0
  %1213 = vmatpush2.bf16.xpose.msra.mxu0 0
  %1214 = vmatprep.subr.bf16.mxu0 0
  %1215 = vmatpush2.bf16.xpose.msra.mxu0 0
  %1216 = vmatprep.subr.bf16.mxu0 0
  %1217 = vmatpush2.bf16.xpose.msra.mxu0 0
  %1218 = vmatprep.subr.bf16.mxu0 0
  %1219 = vmatpush2.bf16.xpose.msra.mxu0 0
  %1220 = vmatprep.subr.bf16.mxu0 0
  %1221 = vmatpush2.bf16.xpose.msra.mxu0 0
  %1222 = vmatprep.subr.bf16.mxu0 0
  %1223 = vmatpush2.bf16.xpose.msra.mxu0 0
  %1224 = vmatprep.subr.bf16.mxu0 0
  %1225 = vmatpush2.bf16.xpose.msra.mxu0 0
  %1226 = vmatprep.mubr.bf16.mxu0 0
  %1227 = vmatmul.mubr.bf16.gmra.mxu0 %v1189
  %v1228 = vpop.f32.mrf.mxu0
  %v1229 = vadd.f32 %v424, %v1228
  %v1230 = vpop.f32.mrf.mxu0
  %v1231 = vpop.f32.mrf.mxu0
  %v1232 = vadd.f32 %v424, %v1231
  %v1233 = vpop.f32.mrf.mxu0
  %1234 = vdwg.mxu0
  %v1235 = vsel %vm476, %v1229, -inf
  %1236 = vmax.xlane.f32.xlu0 %v1235
  %v1237 = vpop.xlane.xlu0 %1236
  %v1238 = vsel %vm476, %v1232, -inf
  %1239 = vmax.xlane.f32.xlu0 %v1238
  %v1240 = vpop.xlane.xlu0 %1239
  %v1241 = vsub.f32 %v1229, %v1237
  %v1242 = vsub.f32 %v1232, %v1240
  %v1243 = vmul.f32 %v1241, 1.442695
  %v1244 = vpow.pop %v1243
  %v1245 = vmul.f32 %v1242, 1.442695
  %v1246 = vpow.pop %v1245
  %v1247 = vsel %vm476, %v1244, 0.0
  %1248 = vadd.xlane.f32.xlu0 %v1247
  %v1249 = vpop.xlane.xlu0 %1248
  %v1250 = vsel %vm476, %v1246, 0.0
  %1251 = vadd.xlane.f32.xlu0 %v1250
  %v1252 = vpop.xlane.xlu0 %1251
  %v1253 = vrcp.pop %v1249
  %v1254 = vrcp.pop %v1252
  %v1255 = vmul.f32 %v1244, %v1253
  %v1256 = vmul.f32 %v1246, %v1254
  %v1257 = vpack.c.bf16 %v1256, %v1255
  %1258 = vrot.lane.b32.xlu0 %v1183, 64
  %v1259 = vpop.permute.xlu0 %1258
  %v1262 = vsel %vm476, %v1257, 0
  %1264 = vmatprep.subr.bf16.mxu0 0
  %1265 = vmatpush1.bf16.msra.mxu0 0
  %1266 = vmatprep.subr.bf16.mxu0 0
  %1267 = vmatpush1.bf16.msra.mxu0 0
  %1268 = vmatprep.subr.bf16.mxu0 0
  %1269 = vmatpush1.bf16.msra.mxu0 0
  %1270 = vmatprep.subr.bf16.mxu0 0
  %1271 = vmatpush1.bf16.msra.mxu0 0
  %1272 = vmatprep.subr.bf16.mxu0 0
  %1273 = vmatpush1.bf16.msra.mxu0 0
  %1274 = vmatprep.subr.bf16.mxu0 0
  %1275 = vmatpush1.bf16.msra.mxu0 0
  %1276 = vmatprep.subr.bf16.mxu0 0
  %1277 = vmatpush1.bf16.msra.mxu0 0
  %1278 = vmatprep.subr.bf16.mxu0 0
  %1279 = vmatpush1.bf16.msra.mxu0 %v1259
  %1280 = vmatprep.subr.bf16.mxu0 0
  %1281 = vmatpush2.bf16.msra.mxu0 0
  %1282 = vmatprep.subr.bf16.mxu0 0
  %1283 = vmatpush2.bf16.msra.mxu0 0
  %1284 = vmatprep.subr.bf16.mxu0 0
  %1285 = vmatpush2.bf16.msra.mxu0 0
  %1286 = vmatprep.subr.bf16.mxu0 0
  %1287 = vmatpush2.bf16.msra.mxu0 0
  %1288 = vmatprep.subr.bf16.mxu0 0
  %1289 = vmatpush2.bf16.msra.mxu0 0
  %1290 = vmatprep.subr.bf16.mxu0 0
  %1291 = vmatpush2.bf16.msra.mxu0 0
  %1292 = vmatprep.subr.bf16.mxu0 0
  %1293 = vmatpush2.bf16.msra.mxu0 0
  %1294 = vmatprep.subr.bf16.mxu0 0
  %1295 = vmatpush2.bf16.msra.mxu0 0
  %1296 = vmatprep.mubr.bf16.mxu0 0
  %1297 = vmatmul.mubr.bf16.gmra.mxu0 %v1262
  %v1298 = vpop.f32.mrf.mxu0
  %v1299 = vadd.f32 0.0, %v1298
  %v1300 = vpop.f32.mrf.mxu0
  %v1301 = vpop.f32.mrf.mxu0
  %v1302 = vadd.f32 0.0, %v1301
  %v1303 = vpop.f32.mrf.mxu0
  %1304 = vdwg.mxu0
  %1306 = vrot.lane.b32.xlu0 %v1184, 96
  %v1307 = vpop.permute.xlu0 %1306
  %v1309 = vsel %vm271, %v1184, 0
  %v1312 = vsel %vm271, %v1307, 0
  %1314 = vmatprep.subr.bf16.mxu0 0
  %1315 = vmatpush1.bf16.xpose.msra.mxu0 0
  %1316 = vmatprep.subr.bf16.mxu0 0
  %1317 = vmatpush1.bf16.xpose.msra.mxu0 0
  %1318 = vmatprep.subr.bf16.mxu0 0
  %1319 = vmatpush1.bf16.xpose.msra.mxu0 0
  %1320 = vmatprep.subr.bf16.mxu0 0
  %1321 = vmatpush1.bf16.xpose.msra.mxu0 0
  %1322 = vmatprep.subr.bf16.mxu0 0
  %1323 = vmatpush1.bf16.xpose.msra.mxu0 0
  %1324 = vmatprep.subr.bf16.mxu0 0
  %1325 = vmatpush1.bf16.xpose.msra.mxu0 0
  %1326 = vmatprep.subr.bf16.mxu0 0
  %1327 = vmatpush1.bf16.xpose.msra.mxu0 0
  %1328 = vmatprep.subr.bf16.mxu0 0
  %1329 = vmatpush1.bf16.xpose.msra.mxu0 %v1312
  %1330 = vmatprep.subr.bf16.mxu0 0
  %1331 = vmatpush2.bf16.xpose.msra.mxu0 0
  %1332 = vmatprep.subr.bf16.mxu0 0
  %1333 = vmatpush2.bf16.xpose.msra.mxu0 0
  %1334 = vmatprep.subr.bf16.mxu0 0
  %1335 = vmatpush2.bf16.xpose.msra.mxu0 0
  %1336 = vmatprep.subr.bf16.mxu0 0
  %1337 = vmatpush2.bf16.xpose.msra.mxu0 0
  %1338 = vmatprep.subr.bf16.mxu0 0
  %1339 = vmatpush2.bf16.xpose.msra.mxu0 0
  %1340 = vmatprep.subr.bf16.mxu0 0
  %1341 = vmatpush2.bf16.xpose.msra.mxu0 0
  %1342 = vmatprep.subr.bf16.mxu0 0
  %1343 = vmatpush2.bf16.xpose.msra.mxu0 0
  %1344 = vmatprep.subr.bf16.mxu0 0
  %1345 = vmatpush2.bf16.xpose.msra.mxu0 0
  %1346 = vmatprep.mubr.bf16.mxu0 0
  %1347 = vmatmul.mubr.bf16.gmra.mxu0 %v1309
  %v1348 = vpop.f32.mrf.mxu0
  %v1349 = vadd.f32 %v551, %v1348
  %v1350 = vpop.f32.mrf.mxu0
  %v1351 = vpop.f32.mrf.mxu0
  %v1352 = vadd.f32 %v551, %v1351
  %v1353 = vpop.f32.mrf.mxu0
  %1354 = vdwg.mxu0
  %v1355 = vsel %vm476, %v1349, -inf
  %1356 = vmax.xlane.f32.xlu0 %v1355
  %v1357 = vpop.xlane.xlu0 %1356
  %v1358 = vsel %vm476, %v1352, -inf
  %1359 = vmax.xlane.f32.xlu0 %v1358
  %v1360 = vpop.xlane.xlu0 %1359
  %v1361 = vsub.f32 %v1349, %v1357
  %v1362 = vsub.f32 %v1352, %v1360
  %v1363 = vmul.f32 %v1361, 1.442695
  %v1364 = vpow.pop %v1363
  %v1365 = vmul.f32 %v1362, 1.442695
  %v1366 = vpow.pop %v1365
  %v1367 = vsel %vm476, %v1364, 0.0
  %1368 = vadd.xlane.f32.xlu0 %v1367
  %v1369 = vpop.xlane.xlu0 %1368
  %v1370 = vsel %vm476, %v1366, 0.0
  %1371 = vadd.xlane.f32.xlu0 %v1370
  %v1372 = vpop.xlane.xlu0 %1371
  %v1373 = vrcp.pop %v1369
  %v1374 = vrcp.pop %v1372
  %v1375 = vmul.f32 %v1364, %v1373
  %v1376 = vmul.f32 %v1366, %v1374
  %v1377 = vpack.c.bf16 %v1376, %v1375
  %1378 = vrot.lane.b32.xlu0 %v1184, 64
  %v1379 = vpop.permute.xlu0 %1378
  %v1382 = vsel %vm476, %v1377, 0
  %1384 = vmatprep.subr.bf16.mxu0 0
  %1385 = vmatpush1.bf16.msra.mxu0 0
  %1386 = vmatprep.subr.bf16.mxu0 0
  %1387 = vmatpush1.bf16.msra.mxu0 0
  %1388 = vmatprep.subr.bf16.mxu0 0
  %1389 = vmatpush1.bf16.msra.mxu0 0
  %1390 = vmatprep.subr.bf16.mxu0 0
  %1391 = vmatpush1.bf16.msra.mxu0 0
  %1392 = vmatprep.subr.bf16.mxu0 0
  %1393 = vmatpush1.bf16.msra.mxu0 0
  %1394 = vmatprep.subr.bf16.mxu0 0
  %1395 = vmatpush1.bf16.msra.mxu0 0
  %1396 = vmatprep.subr.bf16.mxu0 0
  %1397 = vmatpush1.bf16.msra.mxu0 0
  %1398 = vmatprep.subr.bf16.mxu0 0
  %1399 = vmatpush1.bf16.msra.mxu0 %v1379
  %1400 = vmatprep.subr.bf16.mxu0 0
  %1401 = vmatpush2.bf16.msra.mxu0 0
  %1402 = vmatprep.subr.bf16.mxu0 0
  %1403 = vmatpush2.bf16.msra.mxu0 0
  %1404 = vmatprep.subr.bf16.mxu0 0
  %1405 = vmatpush2.bf16.msra.mxu0 0
  %1406 = vmatprep.subr.bf16.mxu0 0
  %1407 = vmatpush2.bf16.msra.mxu0 0
  %1408 = vmatprep.subr.bf16.mxu0 0
  %1409 = vmatpush2.bf16.msra.mxu0 0
  %1410 = vmatprep.subr.bf16.mxu0 0
  %1411 = vmatpush2.bf16.msra.mxu0 0
  %1412 = vmatprep.subr.bf16.mxu0 0
  %1413 = vmatpush2.bf16.msra.mxu0 0
  %1414 = vmatprep.subr.bf16.mxu0 0
  %1415 = vmatpush2.bf16.msra.mxu0 0
  %1416 = vmatprep.mubr.bf16.mxu0 0
  %1417 = vmatmul.mubr.bf16.gmra.mxu0 %v1382
  %v1418 = vpop.f32.mrf.mxu0
  %v1419 = vadd.f32 0.0, %v1418
  %v1420 = vpop.f32.mrf.mxu0
  %v1421 = vpop.f32.mrf.mxu0
  %v1422 = vadd.f32 0.0, %v1421
  %v1423 = vpop.f32.mrf.mxu0
  %1424 = vdwg.mxu0
  %v1425 = vpack.c.bf16 %v1302, %v1299
  %v1426 = vpack.c.bf16 %v1422, %v1419
  %1427 = vrot.lane.b32.xlu0 %v1124, 32
  %v1428 = vpop.permute.xlu0 %1427
  %1429 = vrot.lane.b32.xlu0 %v1125, 32
  %v1430 = vpop.permute.xlu0 %1429
  %v1434 = vsel %vm271, %v1425, 0
  %v1437 = vsel %vm271, %v1426, 0
  %1439 = vmatprep.subr.bf16.mxu0 0
  %1440 = vmatpush1.bf16.msra.mxu0 0
  %1441 = vmatprep.subr.bf16.mxu0 0
  %1442 = vmatpush1.bf16.msra.mxu0 0
  %1443 = vmatprep.subr.bf16.mxu0 0
  %1444 = vmatpush1.bf16.msra.mxu0 0
  %1445 = vmatprep.subr.bf16.mxu0 0
  %1446 = vmatpush1.bf16.msra.mxu0 0
  %1447 = vmatprep.subr.bf16.mxu0 0
  %1448 = vmatpush1.bf16.msra.mxu0 0
  %1449 = vmatprep.subr.bf16.mxu0 0
  %1450 = vmatpush1.bf16.msra.mxu0 0
  %1451 = vmatprep.subr.bf16.mxu0 0
  %1452 = vmatpush1.bf16.msra.mxu0 %v1430
  %1453 = vmatprep.subr.bf16.mxu0 0
  %1454 = vmatpush1.bf16.msra.mxu0 %v1428
  %1455 = vmatprep.subr.bf16.mxu0 0
  %1456 = vmatpush2.bf16.msra.mxu0 0
  %1457 = vmatprep.subr.bf16.mxu0 0
  %1458 = vmatpush2.bf16.msra.mxu0 0
  %1459 = vmatprep.subr.bf16.mxu0 0
  %1460 = vmatpush2.bf16.msra.mxu0 0
  %1461 = vmatprep.subr.bf16.mxu0 0
  %1462 = vmatpush2.bf16.msra.mxu0 0
  %1463 = vmatprep.subr.bf16.mxu0 0
  %1464 = vmatpush2.bf16.msra.mxu0 0
  %1465 = vmatprep.subr.bf16.mxu0 0
  %1466 = vmatpush2.bf16.msra.mxu0 0
  %1467 = vmatprep.subr.bf16.mxu0 0
  %1468 = vmatpush2.bf16.msra.mxu0 0
  %1469 = vmatprep.subr.bf16.mxu0 0
  %1470 = vmatpush2.bf16.msra.mxu0 0
  %1471 = vmatprep.mubr.bf16.mxu0 0
  %1472 = vmatmul.mubr.bf16.gmra.mxu0 %v1434
  %v1473 = vpop.f32.mrf.mxu0
  %v1474 = vadd.f32 0.0, %v1473
  %v1475 = vpop.f32.mrf.mxu0
  %v1476 = vpop.f32.mrf.mxu0
  %v1477 = vadd.f32 0.0, %v1476
  %v1478 = vpop.f32.mrf.mxu0
  %1479 = vmatprep.mubr.bf16.mxu0 0
  %1480 = vmatmul.mubr.bf16.gmra.mxu0 %v1437
  %v1481 = vpop.f32.mrf.mxu0
  %v1482 = vadd.f32 0.0, %v1481
  %v1483 = vpop.f32.mrf.mxu0
  %v1484 = vpop.f32.mrf.mxu0
  %v1485 = vadd.f32 0.0, %v1484
  %v1486 = vpop.f32.mrf.mxu0
  %1487 = vdwg.mxu0
  %v1488 = vadd.f32 %v1015, %v1474
  %v1489 = vadd.f32 %v1016, %v1477
  %v1490 = vadd.f32 %v1017, %v1482
  %v1491 = vadd.f32 %v1018, %v1485
  %v1492 = vsel %vm271, %v1488, 0.0
  %1493 = vadd.xlane.f32.xlu0 %v1492
  %v1494 = vpop.xlane.xlu0 %1493
  %v1495 = vsel %vm271, %v1489, 0.0
  %1496 = vadd.xlane.f32.xlu0 %v1495
  %v1497 = vpop.xlane.xlu0 %1496
  %v1498 = vsel %vm271, %v1490, 0.0
  %1499 = vadd.xlane.f32.xlu0 %v1498
  %v1500 = vpop.xlane.xlu0 %1499
  %v1501 = vsel %vm271, %v1491, 0.0
  %1502 = vadd.xlane.f32.xlu0 %v1501
  %v1503 = vpop.xlane.xlu0 %1502
  %v1504 = vmul.f32 %v1494, %v284
  %v1505 = vmul.f32 %v1497, %v284
  %v1506 = vmul.f32 %v1500, %v284
  %v1507 = vmul.f32 %v1503, %v284
  %v1508 = vmul.f32 %v1488, %v1488
  %v1509 = vmul.f32 %v1489, %v1489
  %v1510 = vmul.f32 %v1490, %v1490
  %v1511 = vmul.f32 %v1491, %v1491
  %v1512 = vsel %vm271, %v1508, 0.0
  %1513 = vadd.xlane.f32.xlu0 %v1512
  %v1514 = vpop.xlane.xlu0 %1513
  %v1515 = vsel %vm271, %v1509, 0.0
  %1516 = vadd.xlane.f32.xlu0 %v1515
  %v1517 = vpop.xlane.xlu0 %1516
  %v1518 = vsel %vm271, %v1510, 0.0
  %1519 = vadd.xlane.f32.xlu0 %v1518
  %v1520 = vpop.xlane.xlu0 %1519
  %v1521 = vsel %vm271, %v1511, 0.0
  %1522 = vadd.xlane.f32.xlu0 %v1521
  %v1523 = vpop.xlane.xlu0 %1522
  %v1524 = vmul.f32 %v1514, %v284
  %v1525 = vmul.f32 %v1517, %v284
  %v1526 = vmul.f32 %v1520, %v284
  %v1527 = vmul.f32 %v1523, %v284
  %v1528 = vmul.f32 %v1504, %v1504
  %v1529 = vmul.f32 %v1505, %v1505
  %v1530 = vmul.f32 %v1506, %v1506
  %v1531 = vmul.f32 %v1507, %v1507
  %v1532 = vsub.f32 %v1524, %v1528
  %v1533 = vsub.f32 %v1525, %v1529
  %v1534 = vsub.f32 %v1526, %v1530
  %v1535 = vsub.f32 %v1527, %v1531
  %v1536 = vsub.f32 %v1488, %v1504
  %v1537 = vsub.f32 %v1489, %v1505
  %v1538 = vsub.f32 %v1490, %v1506
  %v1539 = vsub.f32 %v1491, %v1507
  %v1540 = vadd.f32 %v1532, 1e-05
  %v1541 = vadd.f32 %v1533, 1e-05
  %v1542 = vadd.f32 %v1534, 1e-05
  %v1543 = vadd.f32 %v1535, 1e-05
  %v1544 = vrsqrt.pop %v1540
  %v1545 = vrsqrt.pop %v1541
  %v1546 = vrsqrt.pop %v1542
  %v1547 = vrsqrt.pop %v1543
  %v1548 = vmul.f32 %v1536, %v1544
  %v1549 = vmul.f32 %v1537, %v1545
  %v1550 = vmul.f32 %v1538, %v1546
  %v1551 = vmul.f32 %v1539, %v1547
  %v1552 = vlaneseq
  %v1553 = vshrl.u32 %v1552, 7
  %v1554 = vsub.s32 4, %v1553
  %v1555 = vrot.slane %v25, %v1554
  %v1556 = vmul.f32 %v1548, %v1555
  %v1557 = vmul.f32 %v1549, %v1555
  %v1558 = vmul.f32 %v1550, %v1555
  %v1559 = vmul.f32 %v1551, %v1555
  %v1560 = vlaneseq
  %v1561 = vshrl.u32 %v1560, 7
  %v1562 = vsub.s32 5, %v1561
  %v1563 = vrot.slane %v25, %v1562
  %v1564 = vadd.f32 %v1556, %v1563
  %v1565 = vadd.f32 %v1557, %v1563
  %v1566 = vadd.f32 %v1558, %v1563
  %v1567 = vadd.f32 %v1559, %v1563
  %v1568 = vpack.c.bf16 %v1565, %v1564
  %v1569 = vpack.c.bf16 %v1567, %v1566
  %v1570 = vlaneseq
  %v1571 = vshrl.u32 %v1570, 7
  %v1572 = vsub.s32 6, %v1571
  %v1573 = vrot.slane %v25, %v1572
  %v1578 = vunpack.c.l.b16 %v1025
  %v1579 = vunpack.c.l.b16 %v1026
  %v1580 = vunpack.c.l.b16 %v1027
  %v1581 = vunpack.c.l.b16 %v1028
  %v1582 = vpack.c.b16 %v1579, %v1578
  %v1583 = vpack.c.b16 %v1581, %v1580
  %v1587 = vsel %vm271, %v1568, 0
  %v1590 = vsel %vm271, %v1569, 0
  %1592 = vmatprep.subr.bf16.mxu0 0
  %1593 = vmatpush1.bf16.msra.mxu0 0
  %1594 = vmatprep.subr.bf16.mxu0 0
  %1595 = vmatpush1.bf16.msra.mxu0 0
  %1596 = vmatprep.subr.bf16.mxu0 0
  %1597 = vmatpush1.bf16.msra.mxu0 0
  %1598 = vmatprep.subr.bf16.mxu0 0
  %1599 = vmatpush1.bf16.msra.mxu0 0
  %1600 = vmatprep.subr.bf16.mxu0 0
  %1601 = vmatpush1.bf16.msra.mxu0 0
  %1602 = vmatprep.subr.bf16.mxu0 0
  %1603 = vmatpush1.bf16.msra.mxu0 0
  %1604 = vmatprep.subr.bf16.mxu0 0
  %1605 = vmatpush1.bf16.msra.mxu0 %v1583
  %1606 = vmatprep.subr.bf16.mxu0 0
  %1607 = vmatpush1.bf16.msra.mxu0 %v1582
  %1608 = vmatprep.subr.bf16.mxu0 0
  %1609 = vmatpush2.bf16.msra.mxu0 0
  %1610 = vmatprep.subr.bf16.mxu0 0
  %1611 = vmatpush2.bf16.msra.mxu0 0
  %1612 = vmatprep.subr.bf16.mxu0 0
  %1613 = vmatpush2.bf16.msra.mxu0 0
  %1614 = vmatprep.subr.bf16.mxu0 0
  %1615 = vmatpush2.bf16.msra.mxu0 0
  %1616 = vmatprep.subr.bf16.mxu0 0
  %1617 = vmatpush2.bf16.msra.mxu0 0
  %1618 = vmatprep.subr.bf16.mxu0 0
  %1619 = vmatpush2.bf16.msra.mxu0 0
  %1620 = vmatprep.subr.bf16.mxu0 0
  %1621 = vmatpush2.bf16.msra.mxu0 0
  %1622 = vmatprep.subr.bf16.mxu0 0
  %1623 = vmatpush2.bf16.msra.mxu0 0
  %1624 = vmatprep.mubr.bf16.mxu0 0
  %1625 = vmatmul.mubr.bf16.gmra.mxu0 %v1587
  %v1626 = vpop.f32.mrf.mxu0
  %v1627 = vadd.f32 %v1573, %v1626
  %v1628 = vpop.f32.mrf.mxu0
  %v1629 = vpop.f32.mrf.mxu0
  %v1630 = vadd.f32 %v1573, %v1629
  %v1631 = vpop.f32.mrf.mxu0
  %1632 = vmatprep.mubr.bf16.mxu0 0
  %1633 = vmatmul.mubr.bf16.gmra.mxu0 %v1590
  %v1634 = vpop.f32.mrf.mxu0
  %v1635 = vadd.f32 %v1573, %v1634
  %v1636 = vpop.f32.mrf.mxu0
  %v1637 = vpop.f32.mrf.mxu0
  %v1638 = vadd.f32 %v1573, %v1637
  %v1639 = vpop.f32.mrf.mxu0
  %1640 = vdwg.mxu0
  %v1641 = vmul.f32 %v1627, %v1627
  %v1642 = vmul.f32 %v1630, %v1630
  %v1643 = vmul.f32 %v1635, %v1635
  %v1644 = vmul.f32 %v1638, %v1638
  %v1645 = vmul.f32 %v1627, %v1641
  %v1646 = vmul.f32 %v1630, %v1642
  %v1647 = vmul.f32 %v1635, %v1643
  %v1648 = vmul.f32 %v1638, %v1644
  %v1649 = vmul.f32 %v1645, 0.044715
  %v1650 = vmul.f32 %v1646, 0.044715
  %v1651 = vmul.f32 %v1647, 0.044715
  %v1652 = vmul.f32 %v1648, 0.044715
  %v1653 = vadd.f32 %v1627, %v1649
  %v1654 = vadd.f32 %v1630, %v1650
  %v1655 = vadd.f32 %v1635, %v1651
  %v1656 = vadd.f32 %v1638, %v1652
  %v1657 = vmul.f32 %v1653, 0.7978846
  %v1658 = vmul.f32 %v1654, 0.7978846
  %v1659 = vmul.f32 %v1655, 0.7978846
  %v1660 = vmul.f32 %v1656, 0.7978846
  %v1661 = vtanh.pop %v1657
  %v1662 = vtanh.pop %v1658
  %v1663 = vtanh.pop %v1659
  %v1664 = vtanh.pop %v1660
  %v1665 = vadd.f32 %v1661, 1.0
  %v1666 = vadd.f32 %v1662, 1.0
  %v1667 = vadd.f32 %v1663, 1.0
  %v1668 = vadd.f32 %v1664, 1.0
  %v1669 = vmul.f32 %v1665, 0.5
  %v1670 = vmul.f32 %v1666, 0.5
  %v1671 = vmul.f32 %v1667, 0.5
  %v1672 = vmul.f32 %v1668, 0.5
  %v1673 = vmul.f32 %v1627, %v1669
  %v1674 = vmul.f32 %v1630, %v1670
  %v1675 = vmul.f32 %v1635, %v1671
  %v1676 = vmul.f32 %v1638, %v1672
  %v1677 = vpack.c.bf16 %v1674, %v1673
  %v1678 = vpack.c.bf16 %v1676, %v1675
  %v1687 = vunpack.c.l.b16 %v1030
  %v1688 = vunpack.c.l.b16 %v1031
  %v1689 = vunpack.c.l.b16 %v1032
  %v1690 = vunpack.c.l.b16 %v1033
  %v1691 = vunpack.c.l.b16 %v1034
  %v1692 = vunpack.c.l.b16 %v1035
  %v1693 = vunpack.c.l.b16 %v1036
  %v1694 = vunpack.c.l.b16 %v1037
  %v1695 = vpack.c.b16 %v1688, %v1687
  %v1696 = vpack.c.b16 %v1690, %v1689
  %v1697 = vpack.c.b16 %v1692, %v1691
  %v1698 = vpack.c.b16 %v1694, %v1693
  %v1704 = vsel %vm951, %v1677, 0
  %v1707 = vsel %vm951, %v1678, 0
  %1709 = vmatprep.subr.bf16.mxu0 0
  %1710 = vmatpush1.bf16.msra.mxu0 0
  %1711 = vmatprep.subr.bf16.mxu0 0
  %1712 = vmatpush1.bf16.msra.mxu0 0
  %1713 = vmatprep.subr.bf16.mxu0 0
  %1714 = vmatpush1.bf16.msra.mxu0 0
  %1715 = vmatprep.subr.bf16.mxu0 0
  %1716 = vmatpush1.bf16.msra.mxu0 0
  %1717 = vmatprep.subr.bf16.mxu0 0
  %1718 = vmatpush1.bf16.msra.mxu0 %v1698
  %1719 = vmatprep.subr.bf16.mxu0 0
  %1720 = vmatpush1.bf16.msra.mxu0 %v1697
  %1721 = vmatprep.subr.bf16.mxu0 0
  %1722 = vmatpush1.bf16.msra.mxu0 %v1696
  %1723 = vmatprep.subr.bf16.mxu0 0
  %1724 = vmatpush1.bf16.msra.mxu0 %v1695
  %1725 = vmatprep.subr.bf16.mxu0 0
  %1726 = vmatpush2.bf16.msra.mxu0 0
  %1727 = vmatprep.subr.bf16.mxu0 0
  %1728 = vmatpush2.bf16.msra.mxu0 0
  %1729 = vmatprep.subr.bf16.mxu0 0
  %1730 = vmatpush2.bf16.msra.mxu0 0
  %1731 = vmatprep.subr.bf16.mxu0 0
  %1732 = vmatpush2.bf16.msra.mxu0 0
  %1733 = vmatprep.subr.bf16.mxu0 0
  %1734 = vmatpush2.bf16.msra.mxu0 0
  %1735 = vmatprep.subr.bf16.mxu0 0
  %1736 = vmatpush2.bf16.msra.mxu0 0
  %1737 = vmatprep.subr.bf16.mxu0 0
  %1738 = vmatpush2.bf16.msra.mxu0 0
  %1739 = vmatprep.subr.bf16.mxu0 0
  %1740 = vmatpush2.bf16.msra.mxu0 0
  %1741 = vmatprep.mubr.bf16.mxu0 0
  %1742 = vmatmul.mubr.bf16.gmra.mxu0 %v1704
  %v1743 = vpop.f32.mrf.mxu0
  %v1744 = vadd.f32 0.0, %v1743
  %v1745 = vpop.f32.mrf.mxu0
  %v1746 = vpop.f32.mrf.mxu0
  %v1747 = vadd.f32 0.0, %v1746
  %v1748 = vpop.f32.mrf.mxu0
  %1749 = vmatprep.mubr.bf16.mxu0 0
  %1750 = vmatmul.mubr.bf16.gmra.mxu0 %v1707
  %v1751 = vpop.f32.mrf.mxu0
  %v1752 = vadd.f32 0.0, %v1751
  %v1753 = vpop.f32.mrf.mxu0
  %v1754 = vpop.f32.mrf.mxu0
  %v1755 = vadd.f32 0.0, %v1754
  %v1756 = vpop.f32.mrf.mxu0
  %1757 = vdwg.mxu0
  %v1758 = vadd.f32 %v1488, %v1744
  %v1759 = vadd.f32 %v1489, %v1747
  %v1760 = vadd.f32 %v1490, %v1752
  %v1761 = vadd.f32 %v1491, %v1755
  %v1762 = vlaneseq
  %v1763 = vshrl.u32 %v1762, 7
  %v1764 = vsub.s32 7, %v1763
  %v1765 = vrot.slane %v25, %v1764
  %v1766 = vadd.f32 %v1758, %v1765
  %v1767 = vadd.f32 %v1759, %v1765
  %v1768 = vadd.f32 %v1760, %v1765
  %v1769 = vadd.f32 %v1761, %v1765
  %v1770 = vsel %vm271, %v1766, 0.0
  %1771 = vadd.xlane.f32.xlu0 %v1770
  %v1772 = vpop.xlane.xlu0 %1771
  %v1773 = vsel %vm271, %v1767, 0.0
  %1774 = vadd.xlane.f32.xlu0 %v1773
  %v1775 = vpop.xlane.xlu0 %1774
  %v1776 = vsel %vm271, %v1768, 0.0
  %1777 = vadd.xlane.f32.xlu0 %v1776
  %v1778 = vpop.xlane.xlu0 %1777
  %v1779 = vsel %vm271, %v1769, 0.0
  %1780 = vadd.xlane.f32.xlu0 %v1779
  %v1781 = vpop.xlane.xlu0 %1780
  %v1782 = vmul.f32 %v1772, %v284
  %v1783 = vmul.f32 %v1775, %v284
  %v1784 = vmul.f32 %v1778, %v284
  %v1785 = vmul.f32 %v1781, %v284
  %v1786 = vmul.f32 %v1766, %v1766
  %v1787 = vmul.f32 %v1767, %v1767
  %v1788 = vmul.f32 %v1768, %v1768
  %v1789 = vmul.f32 %v1769, %v1769
  %v1790 = vsel %vm271, %v1786, 0.0
  %1791 = vadd.xlane.f32.xlu0 %v1790
  %v1792 = vpop.xlane.xlu0 %1791
  %v1793 = vsel %vm271, %v1787, 0.0
  %1794 = vadd.xlane.f32.xlu0 %v1793
  %v1795 = vpop.xlane.xlu0 %1794
  %v1796 = vsel %vm271, %v1788, 0.0
  %1797 = vadd.xlane.f32.xlu0 %v1796
  %v1798 = vpop.xlane.xlu0 %1797
  %v1799 = vsel %vm271, %v1789, 0.0
  %1800 = vadd.xlane.f32.xlu0 %v1799
  %v1801 = vpop.xlane.xlu0 %1800
  %v1802 = vmul.f32 %v1792, %v284
  %v1803 = vmul.f32 %v1795, %v284
  %v1804 = vmul.f32 %v1798, %v284
  %v1805 = vmul.f32 %v1801, %v284
  %v1806 = vmul.f32 %v1782, %v1782
  %v1807 = vmul.f32 %v1783, %v1783
  %v1808 = vmul.f32 %v1784, %v1784
  %v1809 = vmul.f32 %v1785, %v1785
  %v1810 = vsub.f32 %v1802, %v1806
  %v1811 = vsub.f32 %v1803, %v1807
  %v1812 = vsub.f32 %v1804, %v1808
  %v1813 = vsub.f32 %v1805, %v1809
  %v1814 = vsub.f32 %v1766, %v1782
  %v1815 = vsub.f32 %v1767, %v1783
  %v1816 = vsub.f32 %v1768, %v1784
  %v1817 = vsub.f32 %v1769, %v1785
  %v1818 = vadd.f32 %v1810, 1e-05
  %v1819 = vadd.f32 %v1811, 1e-05
  %v1820 = vadd.f32 %v1812, 1e-05
  %v1821 = vadd.f32 %v1813, 1e-05
  %v1822 = vrsqrt.pop %v1818
  %v1823 = vrsqrt.pop %v1819
  %v1824 = vrsqrt.pop %v1820
  %v1825 = vrsqrt.pop %v1821
  %v1826 = vmul.f32 %v1814, %v1822
  %v1827 = vmul.f32 %v1815, %v1823
  %v1828 = vmul.f32 %v1816, %v1824
  %v1829 = vmul.f32 %v1817, %v1825
  %v1830 = vlaneseq
  %v1831 = vshrl.u32 %v1830, 7
  %v1832 = vsub.s32 0, %v1831
  %v1833 = vrot.slane %v26, %v1832
  %v1834 = vmul.f32 %v1826, %v1833
  %v1835 = vmul.f32 %v1827, %v1833
  %v1836 = vmul.f32 %v1828, %v1833
  %v1837 = vmul.f32 %v1829, %v1833
  %v1838 = vlaneseq
  %v1839 = vshrl.u32 %v1838, 7
  %v1840 = vsub.s32 1, %v1839
  %v1841 = vrot.slane %v26, %v1840
  %v1842 = vadd.f32 %v1834, %v1841
  %v1843 = vadd.f32 %v1835, %v1841
  %v1844 = vadd.f32 %v1836, %v1841
  %v1845 = vadd.f32 %v1837, %v1841
  %v1846 = vpack.c.bf16 %v1843, %v1842
  %v1847 = vpack.c.bf16 %v1845, %v1844
  %s1848 = scalar_lea.vmem %s2, 32
  %v1849 = vld [vmem:[%s1848] sm:$0xf]
  %v1850 = vld [vmem:[%s1848 + $0x4] sm:$0xf]
  %v1851 = vld [vmem:[%s1848 + $0x8] sm:$0xf]
  %v1852 = vld [vmem:[%s1848 + $0xc] sm:$0xf]
  %v1853 = vlaneseq
  %v1854 = vshrl.u32 %v1853, 7
  %v1855 = vsub.s32 2, %v1854
  %v1856 = vrot.slane %v26, %v1855
  %v1861 = vunpack.c.l.b16 %v1849
  %v1862 = vunpack.c.l.b16 %v1850
  %v1863 = vunpack.c.l.b16 %v1851
  %v1864 = vunpack.c.l.b16 %v1852
  %v1865 = vpack.c.b16 %v1862, %v1861
  %v1866 = vpack.c.b16 %v1864, %v1863
  %v1870 = vsel %vm271, %v1846, 0
  %v1873 = vsel %vm271, %v1847, 0
  %1875 = vmatprep.subr.bf16.mxu0 0
  %1876 = vmatpush1.bf16.msra.mxu0 0
  %1877 = vmatprep.subr.bf16.mxu0 0
  %1878 = vmatpush1.bf16.msra.mxu0 0
  %1879 = vmatprep.subr.bf16.mxu0 0
  %1880 = vmatpush1.bf16.msra.mxu0 0
  %1881 = vmatprep.subr.bf16.mxu0 0
  %1882 = vmatpush1.bf16.msra.mxu0 0
  %1883 = vmatprep.subr.bf16.mxu0 0
  %1884 = vmatpush1.bf16.msra.mxu0 0
  %1885 = vmatprep.subr.bf16.mxu0 0
  %1886 = vmatpush1.bf16.msra.mxu0 0
  %1887 = vmatprep.subr.bf16.mxu0 0
  %1888 = vmatpush1.bf16.msra.mxu0 %v1866
  %1889 = vmatprep.subr.bf16.mxu0 0
  %1890 = vmatpush1.bf16.msra.mxu0 %v1865
  %1891 = vmatprep.subr.bf16.mxu0 0
  %1892 = vmatpush2.bf16.msra.mxu0 0
  %1893 = vmatprep.subr.bf16.mxu0 0
  %1894 = vmatpush2.bf16.msra.mxu0 0
  %1895 = vmatprep.subr.bf16.mxu0 0
  %1896 = vmatpush2.bf16.msra.mxu0 0
  %1897 = vmatprep.subr.bf16.mxu0 0
  %1898 = vmatpush2.bf16.msra.mxu0 0
  %1899 = vmatprep.subr.bf16.mxu0 0
  %1900 = vmatpush2.bf16.msra.mxu0 0
  %1901 = vmatprep.subr.bf16.mxu0 0
  %1902 = vmatpush2.bf16.msra.mxu0 0
  %1903 = vmatprep.subr.bf16.mxu0 0
  %1904 = vmatpush2.bf16.msra.mxu0 0
  %1905 = vmatprep.subr.bf16.mxu0 0
  %1906 = vmatpush2.bf16.msra.mxu0 0
  %1907 = vmatprep.mubr.bf16.mxu0 0
  %1908 = vmatmul.mubr.bf16.gmra.mxu0 %v1870
  %v1909 = vpop.f32.mrf.mxu0
  %v1910 = vadd.f32 %v1856, %v1909
  %v1911 = vpop.f32.mrf.mxu0
  %v1912 = vpop.f32.mrf.mxu0
  %v1913 = vadd.f32 %v1856, %v1912
  %v1914 = vpop.f32.mrf.mxu0
  %1915 = vmatprep.mubr.bf16.mxu0 0
  %1916 = vmatmul.mubr.bf16.gmra.mxu0 %v1873
  %v1917 = vpop.f32.mrf.mxu0
  %v1918 = vadd.f32 %v1856, %v1917
  %v1919 = vpop.f32.mrf.mxu0
  %v1920 = vpop.f32.mrf.mxu0
  %v1921 = vadd.f32 %v1856, %v1920
  %v1922 = vpop.f32.mrf.mxu0
  %1923 = vdwg.mxu0
  %1924 = vst [vmem:[%s6] sm:$0xff] %v1910
  %1925 = vst [vmem:[%s6 + $0x8] sm:$0xff] %v1913
  %1926 = vst [vmem:[%s6 + $0x10] sm:$0xff] %v1918
  %1927 = vst [vmem:[%s6 + $0x18] sm:$0xff] %v1921
  // Predicated region
  $region26: #{bio2token_decoder.1} parent=0 // pred_check
    _
  $region27: #{bio2token_decoder.1} parent=0 // pred_check_branch
    %1929 = sbr.rel (0) target = $region29
  $region28: #{bio2token_decoder.1} parent=0 // pred_region
    _
  $region29: #{bio2token_decoder.1} parent=0 // pred_fallthru
    _
  // Predicated region
  $region30: #{bio2token_decoder.1} parent=0 // pred_check
    _
  $region31: #{bio2token_decoder.1} parent=0 // pred_check_branch
    %1931 = sbr.rel (0) target = $region33
  $region32: #{bio2token_decoder.1} parent=0 // pred_region
    _
  $region33: #{bio2token_decoder.1} parent=0 // pred_fallthru
    _

</llo_original>
